<compile_context>
chip_gen: v6e
topology: v6e:2x2x1
jax: 0.10.0
libtpu: 0.0.40
codegen_flags: <defaults>
</compile_context>

<pallas_src>
import functools
import math

import jax
import jax.numpy as jnp
from jax.experimental import pallas as pl
from jax.experimental.pallas import tpu as pltpu

F32 = jnp.float32
BF16 = jnp.bfloat16
LEAKY_SLOPE = 0.2
BN_EPS = 1e-5


def _round_up(x, m):
    return ((x + m - 1) // m) * m


def _leaky(x):
    # slope in (0,1)  =>  leaky_relu(x) == max(x, slope*x); single VPU max.
    return jnp.maximum(x, LEAKY_SLOPE * x)


# ---------------------------------------------------------------------------
# Stage 1 kernel: conv1 (1x1) + bias + LeakyReLU + conv2 (1x1, no bias),
# plus per-tile partial BatchNorm statistics of the conv2 output.
# ---------------------------------------------------------------------------
def _stage1_kernel(x_ref, w1_ref, b1_ref, w2_ref, y_ref, stats_ref, *, tm, m_true):
    i = pl.program_id(0)

    h = jnp.dot(x_ref[...], w1_ref[...], preferred_element_type=jnp.float32)
    h = _leaky(h + b1_ref[...])
    y = jnp.dot(h.astype(BF16), w2_ref[...], preferred_element_type=jnp.float32)
    y_ref[...] = y.astype(y_ref.dtype)           # bf16 activation store

    # Mask rows that are pure padding of the flattened pixel axis so they do
    # not pollute the BatchNorm statistics (stats taken on the f32 accumulator).
    row = i * tm + jax.lax.broadcasted_iota(jnp.int32, (tm, 1), 0)
    yv = jnp.where(row < m_true, y, 0.0)
    s = jnp.sum(yv, axis=0, keepdims=True)          # (1, C2p)
    ss = jnp.sum(yv * yv, axis=0, keepdims=True)    # (1, C2p)

    sel = jax.lax.broadcasted_iota(jnp.int32, (8, y.shape[-1]), 0)
    stats_ref[...] = jnp.where(sel == 0, s, jnp.where(sel == 1, ss, 0.0))


@functools.lru_cache(maxsize=None)
def _stage1_fn(Mp, cin_p, c1_p, c2_p, TM, m_true):
    grid = (Mp // TM,)
    kernel = functools.partial(_stage1_kernel, tm=TM, m_true=m_true)
    return pl.pallas_call(
        kernel,
        out_shape=(
            jax.ShapeDtypeStruct((Mp, c2_p), BF16),
            jax.ShapeDtypeStruct((Mp // TM, 8, c2_p), F32),
        ),
        grid_spec=pltpu.PrefetchScalarGridSpec(
            num_scalar_prefetch=0,
            grid=grid,
            in_specs=[
                pl.BlockSpec((TM, cin_p), lambda i: (i, 0)),
                pl.BlockSpec((cin_p, c1_p), lambda i: (0, 0)),
                pl.BlockSpec((1, c1_p), lambda i: (0, 0)),
                pl.BlockSpec((c1_p, c2_p), lambda i: (0, 0)),
            ],
            out_specs=(
                pl.BlockSpec((TM, c2_p), lambda i: (i, 0)),
                pl.BlockSpec((None, 8, c2_p), lambda i: (i, 0, 0)),
            ),
        ),
        compiler_params=pltpu.CompilerParams(
            dimension_semantics=("parallel",)),
    )


# ---------------------------------------------------------------------------
# Stage 2 kernel: BatchNorm apply (precomputed scale/shift) + LeakyReLU +
# conv3 (1x1, no bias) with the single output channel padded to 128 lanes.
# ---------------------------------------------------------------------------
def _stage2_kernel(y_ref, scale_ref, shift_ref, w3_ref, o_ref):
    z = _leaky(y_ref[...].astype(jnp.float32) * scale_ref[...] + shift_ref[...])
    o_ref[...] = jnp.dot(z.astype(BF16), w3_ref[...],
                         preferred_element_type=jnp.float32)


@functools.lru_cache(maxsize=None)
def _stage2_fn(Mp, c2_p, cout_p, TM):
    grid = (Mp // TM,)
    return pl.pallas_call(
        _stage2_kernel,
        out_shape=jax.ShapeDtypeStruct((Mp, cout_p), F32),
        grid_spec=pltpu.PrefetchScalarGridSpec(
            num_scalar_prefetch=0,
            grid=grid,
            in_specs=[
                pl.BlockSpec((TM, c2_p), lambda i: (i, 0)),
                pl.BlockSpec((1, c2_p), lambda i: (0, 0)),
                pl.BlockSpec((1, c2_p), lambda i: (0, 0)),
                pl.BlockSpec((c2_p, cout_p), lambda i: (0, 0)),
            ],
            out_specs=pl.BlockSpec((TM, cout_p), lambda i: (i, 0)),
        ),
        compiler_params=pltpu.CompilerParams(
            dimension_semantics=("parallel",)),
    )


# ---------------------------------------------------------------------------
# Parameters.  PyTorch layout: Conv2d 1x1 weight is (out, in, 1, 1) -> (out, in).
# norm_layer = BatchNorm2d (default)  =>  use_bias = False for conv2 / conv3.
# ---------------------------------------------------------------------------
def init_params(key, input_nc=3, ndf=64):
    k1, k2, k3 = jax.random.split(key, 3)

    def w(k, cout, cin):
        return jax.random.normal(k, (cout, cin), F32) * (1.0 / math.sqrt(cin))

    return dict(
        w1=w(k1, ndf, input_nc),
        b1=jnp.zeros((ndf,), F32),
        w2=w(k2, 2 * ndf, ndf),                 # bias=False (BatchNorm norm layer)
        bn_gamma=jnp.ones((2 * ndf,), F32),
        bn_beta=jnp.zeros((2 * ndf,), F32),
        w3=w(k3, 1, 2 * ndf),                   # bias=False
    )


def prepare_params(p):
    """One-time prep: transpose to (in, out), pad channels to 128 lanes, cast
    matmul operands to bf16.  Hoisted out of the per-call path."""
    ndf = p["w1"].shape[0]
    input_nc = p["w1"].shape[1]
    cin_p = _round_up(input_nc, 128)
    c1_p = _round_up(ndf, 128)
    c2_p = _round_up(2 * ndf, 128)
    cout_p = 128                                # lane-dense final output (Cout=1 -> 128)

    def pad_w(w, rows, cols):
        wt = jnp.transpose(w).astype(F32)       # (in, out)
        wt = jnp.pad(wt, ((0, rows - wt.shape[0]), (0, cols - wt.shape[1])))
        return wt.astype(BF16)

    return dict(
        w1=pad_w(p["w1"], cin_p, c1_p),
        b1=jnp.pad(p["b1"].astype(F32), (0, c1_p - ndf)).reshape(1, c1_p),
        w2=pad_w(p["w2"], c1_p, c2_p),
        w3=pad_w(p["w3"], c2_p, cout_p),
        gamma=jnp.pad(p["bn_gamma"].astype(F32), (0, c2_p - 2 * ndf)).reshape(1, c2_p),
        beta=jnp.pad(p["bn_beta"].astype(F32), (0, c2_p - 2 * ndf)).reshape(1, c2_p),
    )


def _pick_tile(M):
    if M >= 4096:
        return 1024
    if M >= 1024:
        return 512
    if M >= 256:
        return 256
    return _round_up(M, 8)


# ---------------------------------------------------------------------------
# Forward pass (PixelDiscriminator.forward).  Jit the whole thing.
# ---------------------------------------------------------------------------
def pixel_discriminator_forward(pp, x_nchw):
    N, Cin, H, W = x_nchw.shape
    cin_p, c1_p = pp["w1"].shape
    c2_p = pp["w2"].shape[1]
    cout_p = pp["w3"].shape[1]

    M = N * H * W
    TM = _pick_tile(M)
    Mp = _round_up(M, TM)

    # NCHW -> pixel-major (M, Cin): cast to bf16 first (half the bytes moved
    # by the transpose), then pad channels/rows for the MXU.
    x = jnp.transpose(x_nchw.astype(BF16), (0, 2, 3, 1)).reshape(M, Cin)
    x = jnp.pad(x, ((0, Mp - M), (0, cin_p - Cin)))

    y, stats = _stage1_fn(Mp, cin_p, c1_p, c2_p, TM, M)(
        x, pp["w1"], pp["b1"], pp["w2"])

    # Combine per-tile partial sums -> BatchNorm (training-mode batch stats,
    # biased variance, as nn.BatchNorm2d uses for normalization).
    # TODO(synk): running-mean/var buffer updates (training side effect) are not modeled.
    ssum = jnp.sum(stats[:, 0, :], axis=0)
    ssq = jnp.sum(stats[:, 1, :], axis=0)
    mean = ssum / M
    var = jnp.maximum(ssq / M - mean * mean, 0.0)
    scale = (pp["gamma"][0] * jax.lax.rsqrt(var + BN_EPS)).reshape(1, c2_p)
    shift = (pp["beta"][0] - mean * scale[0]).reshape(1, c2_p)

    out = _stage2_fn(Mp, c2_p, cout_p, TM)(y, scale, shift, pp["w3"])
    out = out[:M, :1].reshape(N, H, W, 1)
    return jnp.transpose(out, (0, 3, 1, 2))     # NCHW (N, 1, H, W)


forward = jax.jit(pixel_discriminator_forward)


# ---------------------------------------------------------------------------
# Pure-JAX f32 reference (same math, no Pallas) for a numerical sanity check.
# ---------------------------------------------------------------------------
def reference_forward(p, x_nchw):
    x = jnp.transpose(x_nchw.astype(F32), (0, 2, 3, 1))           # NHWC
    h = jnp.einsum("nhwc,oc->nhwo", x, p["w1"]) + p["b1"]
    h = jnp.where(h >= 0, h, LEAKY_SLOPE * h)
    y = jnp.einsum("nhwc,oc->nhwo", h, p["w2"])
    mean = jnp.mean(y, axis=(0, 1, 2))
    var = jnp.mean(jnp.square(y - mean), axis=(0, 1, 2))
    z = (y - mean) * jax.lax.rsqrt(var + BN_EPS) * p["bn_gamma"] + p["bn_beta"]
    z = jnp.where(z >= 0, z, LEAKY_SLOPE * z)
    o = jnp.einsum("nhwc,oc->nhwo", z, p["w3"])
    return jnp.transpose(o, (0, 3, 1, 2))


if __name__ == "__main__":
    key = jax.random.PRNGKey(0)
    kp, kx = jax.random.split(key)

    # Small shapes consistent with the module: batch=2, input_nc=3, 16x16, ndf=32.
    input_nc, ndf = 3, 32
    N, H, W = 2, 16, 16

    params = init_params(kp, input_nc=input_nc, ndf=ndf)
    prepped = prepare_params(params)
    x = jax.random.normal(kx, (N, input_nc, H, W), F32)

    out = jax.block_until_ready(forward(prepped, x))
    assert out.shape == (N, 1, H, W)
    assert bool(jnp.all(jnp.isfinite(out)))

    ref = reference_forward(params, x)
    rel_err = float(jnp.max(jnp.abs(out - ref)) / (jnp.max(jnp.abs(ref)) + 1e-6))
    assert rel_err < 0.08, f"relative error too large: {rel_err}"

    print("KERNEL_OK")
</pallas_src>

<mosaic_0001>
module attributes {stable_mosaic.version = 11 : i64} {
  func.func @_stage1_kernel(%arg0: i32, %arg1: memref<256x128xbf16, #tpu.memory_space<vmem>>, %arg2: memref<128x128xbf16, #tpu.memory_space<vmem>>, %arg3: memref<1x128xf32, #tpu.memory_space<vmem>>, %arg4: memref<128x128xbf16, #tpu.memory_space<vmem>>, %arg5: memref<256x128xbf16, #tpu.memory_space<vmem>>, %arg6: memref<1x8x128xf32, #tpu.memory_space<vmem>>) attributes {dimension_semantics = [#tpu.dimension_semantics<parallel>], iteration_bounds = array<i64: 2>, scalar_prefetch = 0 : i64, scratch_operands = 0 : i64, tpu.core_type = #tpu.core_type<tc>, window_params = [{transform_indices = @transform_0, window_bounds = array<i64: 256, 128>}, {pipeline_mode = #tpu.pipeline_mode<synchronous>, transform_indices = @transform_1, window_bounds = array<i64: 128, 128>}, {pipeline_mode = #tpu.pipeline_mode<synchronous>, transform_indices = @transform_2, window_bounds = array<i64: 1, 128>}, {pipeline_mode = #tpu.pipeline_mode<synchronous>, transform_indices = @transform_3, window_bounds = array<i64: 128, 128>}, {transform_indices = @transform_4, window_bounds = array<i64: 256, 128>}, {transform_indices = @transform_5, window_bounds = array<i64: 1, 8, 128>}]} {
    %c0 = arith.constant 0 : index
    %c0_0 = arith.constant 0 : index
    %0 = vector.load %arg1[%c0, %c0_0] : memref<256x128xbf16, #tpu.memory_space<vmem>>, vector<256x128xbf16>
    %c0_1 = arith.constant 0 : index
    %c0_2 = arith.constant 0 : index
    %1 = vector.load %arg2[%c0_1, %c0_2] : memref<128x128xbf16, #tpu.memory_space<vmem>>, vector<128x128xbf16>
    %cst = arith.constant dense<0.000000e+00> : vector<256x128xf32>
    %2 = tpu.matmul %0, %1, %cst {dimension_numbers = #tpu.dot_dimension_numbers<[1], [0], [0], [1], [0, 0, 1, 1], [], []>} : vector<256x128xbf16>, vector<128x128xbf16>, vector<256x128xf32> -> vector<256x128xf32>
    %c0_3 = arith.constant 0 : index
    %c0_4 = arith.constant 0 : index
    %3 = vector.load %arg3[%c0_3, %c0_4] : memref<1x128xf32, #tpu.memory_space<vmem>>, vector<1x128xf32>
    %4 = vector.broadcast %3 : vector<1x128xf32> to vector<256x128xf32>
    %5 = arith.addf %2, %4 : vector<256x128xf32>
    %cst_5 = arith.constant 2.000000e-01 : f32
    %6 = vector.broadcast %cst_5 : f32 to vector<256x128xf32>
    %7 = arith.mulf %6, %5 : vector<256x128xf32>
    %8 = arith.maximumf %5, %7 : vector<256x128xf32>
    %9 = arith.truncf %8 : vector<256x128xf32> to vector<256x128xbf16>
    %c0_6 = arith.constant 0 : index
    %c0_7 = arith.constant 0 : index
    %10 = vector.load %arg4[%c0_6, %c0_7] : memref<128x128xbf16, #tpu.memory_space<vmem>>, vector<128x128xbf16>
    %cst_8 = arith.constant dense<0.000000e+00> : vector<256x128xf32>
    %11 = tpu.matmul %9, %10, %cst_8 {dimension_numbers = #tpu.dot_dimension_numbers<[1], [0], [0], [1], [0, 0, 1, 1], [], []>} : vector<256x128xbf16>, vector<128x128xbf16>, vector<256x128xf32> -> vector<256x128xf32>
    %12 = arith.truncf %11 : vector<256x128xf32> to vector<256x128xbf16>
    %c0_9 = arith.constant 0 : index
    %c0_10 = arith.constant 0 : index
    %13 = vector.load %arg5[%c0_9, %c0_10] : memref<256x128xbf16, #tpu.memory_space<vmem>>, vector<256x128xbf16>
    tpu.vector_store %arg5[%c0_9, %c0_10], %12 {strides = array<i32>} : memref<256x128xbf16, #tpu.memory_space<vmem>>, vector<256x128xbf16>,
    %c256_i32 = arith.constant 256 : i32
    %14 = arith.muli %arg0, %c256_i32 : i32
    %15 = tpu.iota {dimensions = array<i32: 0>} : vector<256x1xi32>
    %16 = vector.broadcast %14 : i32 to vector<256x1xi32>
    %17 = arith.addi %16, %15 : vector<256x1xi32>
    %c512_i32 = arith.constant 512 : i32
    %18 = vector.broadcast %c512_i32 : i32 to vector<256x1xi32>
    %19 = arith.cmpi slt, %17, %18 : vector<256x1xi32>
    %cst_11 = arith.constant 0.000000e+00 : f32
    %20 = vector.shape_cast %19 : vector<256x1xi1> to vector<256x1xi1>
    %21 = vector.broadcast %20 : vector<256x1xi1> to vector<256x128xi1>
    %22 = vector.broadcast %cst_11 : f32 to vector<256x128xf32>
    %23 = arith.select %21, %11, %22 : vector<256x128xi1>, vector<256x128xf32>
    %cst_12 = arith.constant dense<0.000000e+00> : vector<128xf32>
    %24 = vector.multi_reduction <add>, %23, %cst_12 [0] : vector<256x128xf32> to vector<128xf32>
    %25 = vector.shape_cast %24 : vector<128xf32> to vector<1x128xf32>
    %26 = arith.mulf %23, %23 : vector<256x128xf32>
    %cst_13 = arith.constant dense<0.000000e+00> : vector<128xf32>
    %27 = vector.multi_reduction <add>, %26, %cst_13 [0] : vector<256x128xf32> to vector<128xf32>
    %28 = vector.shape_cast %27 : vector<128xf32> to vector<1x128xf32>
    %29 = tpu.iota {dimensions = array<i32: 0>} : vector<8x128xi32>
    %c0_i32 = arith.constant 0 : i32
    %30 = vector.broadcast %c0_i32 : i32 to vector<8x128xi32>
    %31 = arith.cmpi eq, %29, %30 : vector<8x128xi32>
    %c1_i32 = arith.constant 1 : i32
    %32 = vector.broadcast %c1_i32 : i32 to vector<8x128xi32>
    %33 = arith.cmpi eq, %29, %32 : vector<8x128xi32>
    %cst_14 = arith.constant 0.000000e+00 : f32
    %34 = vector.shape_cast %28 : vector<1x128xf32> to vector<1x128xf32>
    %35 = vector.broadcast %34 : vector<1x128xf32> to vector<8x128xf32>
    %36 = vector.broadcast %cst_14 : f32 to vector<8x128xf32>
    %37 = arith.select %33, %35, %36 : vector<8x128xi1>, vector<8x128xf32>
    %38 = vector.shape_cast %25 : vector<1x128xf32> to vector<1x128xf32>
    %39 = vector.broadcast %38 : vector<1x128xf32> to vector<8x128xf32>
    %40 = arith.select %31, %39, %37 : vector<8x128xi1>, vector<8x128xf32>
    %c0_15 = arith.constant 0 : index
    %c0_16 = arith.constant 0 : index
    %c0_17 = arith.constant 0 : index
    %41 = vector.load %arg6[%c0_15, %c0_16, %c0_17] : memref<1x8x128xf32, #tpu.memory_space<vmem>>, vector<1x8x128xf32>
    %42 = vector.shape_cast %41 : vector<1x8x128xf32> to vector<8x128xf32>
    %43 = vector.shape_cast %40 : vector<8x128xf32> to vector<1x8x128xf32>
    tpu.vector_store %arg6[%c0_15, %c0_16, %c0_17], %43 {strides = array<i32>} : memref<1x8x128xf32, #tpu.memory_space<vmem>>, vector<1x8x128xf32>,
    return
  }
  func.func @transform_0(%arg0: i32) -> (i32, i32) {
    %c0_i32 = arith.constant 0 : i32
    %c0_i32_0 = arith.constant 0 : i32
    return %arg0, %c0_i32 : i32, i32
  }
  func.func @transform_1(%arg0: i32) -> (i32, i32) {
    %c0_i32 = arith.constant 0 : i32
    %c0_i32_0 = arith.constant 0 : i32
    %c0_i32_1 = arith.constant 0 : i32
    return %c0_i32, %c0_i32_0 : i32, i32
  }
  func.func @transform_2(%arg0: i32) -> (i32, i32) {
    %c0_i32 = arith.constant 0 : i32
    %c0_i32_0 = arith.constant 0 : i32
    %c0_i32_1 = arith.constant 0 : i32
    return %c0_i32, %c0_i32_0 : i32, i32
  }
  func.func @transform_3(%arg0: i32) -> (i32, i32) {
    %c0_i32 = arith.constant 0 : i32
    %c0_i32_0 = arith.constant 0 : i32
    %c0_i32_1 = arith.constant 0 : i32
    return %c0_i32, %c0_i32_0 : i32, i32
  }
  func.func @transform_4(%arg0: i32) -> (i32, i32) {
    %c0_i32 = arith.constant 0 : i32
    %c0_i32_0 = arith.constant 0 : i32
    return %arg0, %c0_i32 : i32, i32
  }
  func.func @transform_5(%arg0: i32) -> (i32, i32, i32) {
    %c0_i32 = arith.constant 0 : i32
    %c0_i32_0 = arith.constant 0 : i32
    %c0_i32_1 = arith.constant 0 : i32
    return %arg0, %c0_i32, %c0_i32_0 : i32, i32, i32
  }
}

module attributes {stable_mosaic.version = 11 : i64} {
  func.func @_stage2_kernel(%arg0: i32, %arg1: memref<256x128xbf16, #tpu.memory_space<vmem>>, %arg2: memref<1x128xf32, #tpu.memory_space<vmem>>, %arg3: memref<1x128xf32, #tpu.memory_space<vmem>>, %arg4: memref<128x128xbf16, #tpu.memory_space<vmem>>, %arg5: memref<256x128xf32, #tpu.memory_space<vmem>>) attributes {dimension_semantics = [#tpu.dimension_semantics<parallel>], iteration_bounds = array<i64: 2>, scalar_prefetch = 0 : i64, scratch_operands = 0 : i64, tpu.core_type = #tpu.core_type<tc>, window_params = [{transform_indices = @transform_0, window_bounds = array<i64: 256, 128>}, {pipeline_mode = #tpu.pipeline_mode<synchronous>, transform_indices = @transform_1, window_bounds = array<i64: 1, 128>}, {pipeline_mode = #tpu.pipeline_mode<synchronous>, transform_indices = @transform_2, window_bounds = array<i64: 1, 128>}, {pipeline_mode = #tpu.pipeline_mode<synchronous>, transform_indices = @transform_3, window_bounds = array<i64: 128, 128>}, {transform_indices = @transform_4, window_bounds = array<i64: 256, 128>}]} {
    %c0 = arith.constant 0 : index
    %c0_0 = arith.constant 0 : index
    %0 = vector.load %arg1[%c0, %c0_0] : memref<256x128xbf16, #tpu.memory_space<vmem>>, vector<256x128xbf16>
    %1 = arith.extf %0 : vector<256x128xbf16> to vector<256x128xf32>
    %c0_1 = arith.constant 0 : index
    %c0_2 = arith.constant 0 : index
    %2 = vector.load %arg2[%c0_1, %c0_2] : memref<1x128xf32, #tpu.memory_space<vmem>>, vector<1x128xf32>
    %3 = vector.broadcast %2 : vector<1x128xf32> to vector<256x128xf32>
    %4 = arith.mulf %1, %3 : vector<256x128xf32>
    %c0_3 = arith.constant 0 : index
    %c0_4 = arith.constant 0 : index
    %5 = vector.load %arg3[%c0_3, %c0_4] : memref<1x128xf32, #tpu.memory_space<vmem>>, vector<1x128xf32>
    %6 = vector.broadcast %5 : vector<1x128xf32> to vector<256x128xf32>
    %7 = arith.addf %4, %6 : vector<256x128xf32>
    %cst = arith.constant 2.000000e-01 : f32
    %8 = vector.broadcast %cst : f32 to vector<256x128xf32>
    %9 = arith.mulf %8, %7 : vector<256x128xf32>
    %10 = arith.maximumf %7, %9 : vector<256x128xf32>
    %11 = arith.truncf %10 : vector<256x128xf32> to vector<256x128xbf16>
    %c0_5 = arith.constant 0 : index
    %c0_6 = arith.constant 0 : index
    %12 = vector.load %arg4[%c0_5, %c0_6] : memref<128x128xbf16, #tpu.memory_space<vmem>>, vector<128x128xbf16>
    %cst_7 = arith.constant dense<0.000000e+00> : vector<256x128xf32>
    %13 = tpu.matmul %11, %12, %cst_7 {dimension_numbers = #tpu.dot_dimension_numbers<[1], [0], [0], [1], [0, 0, 1, 1], [], []>} : vector<256x128xbf16>, vector<128x128xbf16>, vector<256x128xf32> -> vector<256x128xf32>
    %c0_8 = arith.constant 0 : index
    %c0_9 = arith.constant 0 : index
    %14 = vector.load %arg5[%c0_8, %c0_9] : memref<256x128xf32, #tpu.memory_space<vmem>>, vector<256x128xf32>
    tpu.vector_store %arg5[%c0_8, %c0_9], %13 {strides = array<i32>} : memref<256x128xf32, #tpu.memory_space<vmem>>, vector<256x128xf32>,
    return
  }
  func.func @transform_0(%arg0: i32) -> (i32, i32) {
    %c0_i32 = arith.constant 0 : i32
    %c0_i32_0 = arith.constant 0 : i32
    return %arg0, %c0_i32 : i32, i32
  }
  func.func @transform_1(%arg0: i32) -> (i32, i32) {
    %c0_i32 = arith.constant 0 : i32
    %c0_i32_0 = arith.constant 0 : i32
    %c0_i32_1 = arith.constant 0 : i32
    return %c0_i32, %c0_i32_0 : i32, i32
  }
  func.func @transform_2(%arg0: i32) -> (i32, i32) {
    %c0_i32 = arith.constant 0 : i32
    %c0_i32_0 = arith.constant 0 : i32
    %c0_i32_1 = arith.constant 0 : i32
    return %c0_i32, %c0_i32_0 : i32, i32
  }
  func.func @transform_3(%arg0: i32) -> (i32, i32) {
    %c0_i32 = arith.constant 0 : i32
    %c0_i32_0 = arith.constant 0 : i32
    %c0_i32_1 = arith.constant 0 : i32
    return %c0_i32, %c0_i32_0 : i32, i32
  }
  func.func @transform_4(%arg0: i32) -> (i32, i32) {
    %c0_i32 = arith.constant 0 : i32
    %c0_i32_0 = arith.constant 0 : i32
    return %arg0, %c0_i32 : i32, i32
  }
}

</mosaic_0001>

<llo_original>
// kernel: pixel_discriminator_forward.3
$region0: #{pixel_discriminator_forward.3}
  #allocation0 [shape = 'u32[]', space=smem, size = 0x4, offset = 0x4, fixed_abs, tag = 'smem constant byte address 0x4 - core index']
  #allocation1 [shape = 'u32[144,128]{1,0:T(1,128)}', space=vmem, size = 0x12000, scoped, tag = 'internal scratch']
  %s0 = inlined_call_operand.vmem [shape: bf16[512,128], index: 0, kind: input, shape index: {}]
  %s1 = inlined_call_operand.vmem [shape: f32[1,128], index: 1, kind: input, shape index: {}]
  %s2 = inlined_call_operand.vmem [shape: f32[1,128], index: 2, kind: input, shape index: {}]
  %s3 = inlined_call_operand.vmem [shape: bf16[128,128], index: 3, kind: input, shape index: {}]
  %s4 = inlined_call_operand.vmem [shape: f32[512,128], index: 4, kind: output, shape index: {}]
  %s5 = sld [smem:[#allocation0]]
  $region49: #{pixel_discriminator_forward.3} parent=0
    _
  %s7 = ssub.s32 1, %s5
  %s8 = scalar_select 0, %s7, %s5
  loop: start=0, step=1, limit=4
  $region2: #{pixel_discriminator_forward.3} parent=0 // loop_pre_header
    _
  $region3: #{pixel_discriminator_forward.3} parent=0 // loop_header
    %s10 = sphi 0, %s14
    %p11 = scmp.ge.s32.totalorder %s10, 4
    %s20 = sphi 0, %s22
    %s23 = sphi 0, %s20
    %s24 = sphi 0, %s23
    %s40 = sphi 0, %s24
    %s44 = sphi 0, %s44
    %s46 = sphi 0, %s44
    %s47 = sphi 0, %s46
    %s61 = sphi 0, %s47
    %s65 = sphi 0, %s65
    %s67 = sphi 0, %s65
    %s68 = sphi 0, %s67
    %s82 = sphi 0, %s68
    %s86 = sphi 0, %s86
    %s88 = sphi 0, %s86
    %s89 = sphi 0, %s88
    %s103 = sphi 0, %s89
    %s109 = sphi 0, %s111
    %s112 = sphi 0, %s109
    %s113 = sphi 0, %s112
    %s129 = sphi 0, %s113
  $region4: #{pixel_discriminator_forward.3} parent=0 // loop_header_branch
    %13 = sbr.rel (%p11) target = $region8
  $region5: #{pixel_discriminator_forward.3} parent=0 // loop_body
    %s15 = ssub.s32 %s10, 1
    %s16 = ssub.s32 %s10, 2
    %s17 = sadd.s32 %s10, 1
    %s18 = ssub.s32 %s10, %s17
    %p19 = scmp.eq.s32.totalorder %s18, 0
    %s21 = sadd.s32 %s20, 1
    %s22 = scalar_select %p19, %s20, %s21
    %p25 = pneg %p19
    %p26 = scmp.eq.s32.totalorder %s10, 1
    %p27 = por %p25, %p26
    %p28 = scmp.ne.s32.totalorder %s20, %s23
    %p29 = scmp.eq.s32.totalorder %s10, 0
    %p30 = por %p28, %p29
    %p31 = scmp.ne.s32.totalorder %s20, %s23
    %p32 = scmp.eq.s32.totalorder %s15, 1
    %p33 = por %p31, %p32
    %p34 = scmp.ne.s32.totalorder %s23, %s24
    %p35 = scmp.eq.s32.totalorder %s15, 0
    %p36 = por %p34, %p35
    %p37 = scmp.ne.s32.totalorder %s23, %s24
    %p38 = scmp.eq.s32.totalorder %s16, 1
    %p39 = por %p37, %p38
    %p41 = scmp.ne.s32.totalorder %s24, %s40
    %p42 = scmp.eq.s32.totalorder %s16, 0
    %p43 = por %p41, %p42
    %s45 = sadd.s32 %s44, 1
    %p48 = scmp.eq.s32.totalorder %s10, 1
    %p49 = scmp.ne.s32.totalorder %s44, %s46
    %p50 = scmp.eq.s32.totalorder %s10, 0
    %p51 = por %p49, %p50
    %p52 = scmp.ne.s32.totalorder %s44, %s46
    %p53 = scmp.eq.s32.totalorder %s15, 1
    %p54 = por %p52, %p53
    %p55 = scmp.ne.s32.totalorder %s46, %s47
    %p56 = scmp.eq.s32.totalorder %s15, 0
    %p57 = por %p55, %p56
    %p58 = scmp.ne.s32.totalorder %s46, %s47
    %p59 = scmp.eq.s32.totalorder %s16, 1
    %p60 = por %p58, %p59
    %p62 = scmp.ne.s32.totalorder %s47, %s61
    %p63 = scmp.eq.s32.totalorder %s16, 0
    %p64 = por %p62, %p63
    %s66 = sadd.s32 %s65, 1
    %p69 = scmp.eq.s32.totalorder %s10, 1
    %p70 = scmp.ne.s32.totalorder %s65, %s67
    %p71 = scmp.eq.s32.totalorder %s10, 0
    %p72 = por %p70, %p71
    %p73 = scmp.ne.s32.totalorder %s65, %s67
    %p74 = scmp.eq.s32.totalorder %s15, 1
    %p75 = por %p73, %p74
    %p76 = scmp.ne.s32.totalorder %s67, %s68
    %p77 = scmp.eq.s32.totalorder %s15, 0
    %p78 = por %p76, %p77
    %p79 = scmp.ne.s32.totalorder %s67, %s68
    %p80 = scmp.eq.s32.totalorder %s16, 1
    %p81 = por %p79, %p80
    %p83 = scmp.ne.s32.totalorder %s68, %s82
    %p84 = scmp.eq.s32.totalorder %s16, 0
    %p85 = por %p83, %p84
    %s87 = sadd.s32 %s86, 1
    %p90 = scmp.eq.s32.totalorder %s10, 1
    %p91 = scmp.ne.s32.totalorder %s86, %s88
    %p92 = scmp.eq.s32.totalorder %s10, 0
    %p93 = por %p91, %p92
    %p94 = scmp.ne.s32.totalorder %s86, %s88
    %p95 = scmp.eq.s32.totalorder %s15, 1
    %p96 = por %p94, %p95
    %p97 = scmp.ne.s32.totalorder %s88, %s89
    %p98 = scmp.eq.s32.totalorder %s15, 0
    %p99 = por %p97, %p98
    %p100 = scmp.ne.s32.totalorder %s88, %s89
    %p101 = scmp.eq.s32.totalorder %s16, 1
    %p102 = por %p100, %p101
    %p104 = scmp.ne.s32.totalorder %s89, %s103
    %p105 = scmp.eq.s32.totalorder %s16, 0
    %p106 = por %p104, %p105
    %s107 = ssub.s32 %s10, %s17
    %p108 = scmp.eq.s32.totalorder %s107, 0
    %s110 = sadd.s32 %s109, 1
    %s111 = scalar_select %p108, %s109, %s110
    %p114 = pneg %p108
    %p115 = scmp.eq.s32.totalorder %s10, 1
    %p116 = por %p114, %p115
    %p117 = scmp.ne.s32.totalorder %s109, %s112
    %p118 = scmp.eq.s32.totalorder %s10, 0
    %p119 = por %p117, %p118
    %p120 = scmp.ne.s32.totalorder %s109, %s112
    %p121 = scmp.eq.s32.totalorder %s15, 1
    %p122 = por %p120, %p121
    %p123 = scmp.ne.s32.totalorder %s112, %s113
    %p124 = scmp.eq.s32.totalorder %s15, 0
    %p125 = por %p123, %p124
    %p126 = scmp.ne.s32.totalorder %s112, %s113
    %p127 = scmp.eq.s32.totalorder %s16, 1
    %p128 = por %p126, %p127
    %p130 = scmp.ne.s32.totalorder %s113, %s129
    %p131 = scmp.eq.s32.totalorder %s16, 0
    %p132 = por %p130, %p131
    %p133 = scmp.le.s32.totalorder 1, %s10
    %p134 = scmp.lt.s32.totalorder %s10, 3
    %p135 = pnand %p133, %p134
    %p136 = pneg %p135
    // Predicated region
    $region9: #{pixel_discriminator_forward.3} parent=5 // pred_check
      _
    $region10: #{pixel_discriminator_forward.3} parent=5 // pred_check_branch
      %138 = sbr.rel (%p135) target = $region12
    $region11: #{pixel_discriminator_forward.3} parent=5 // pred_region
      %s139 = ssub.s32 %s10, 1
      // Predicated region
      $region13: #{pixel_discriminator_forward.3} parent=11 // pred_check
        %p140 = pneg %p57
      $region14: #{pixel_discriminator_forward.3} parent=11 // pred_check_branch
        %142 = sbr.rel (%p140) target = $region16
      $region15: #{pixel_discriminator_forward.3} parent=11 // pred_region
        _
      $region16: #{pixel_discriminator_forward.3} parent=11 // pred_fallthru
        _
      // Predicated region
      $region17: #{pixel_discriminator_forward.3} parent=11 // pred_check
        %p143 = pneg %p78
      $region18: #{pixel_discriminator_forward.3} parent=11 // pred_check_branch
        %145 = sbr.rel (%p143) target = $region20
      $region19: #{pixel_discriminator_forward.3} parent=11 // pred_region
        _
      $region20: #{pixel_discriminator_forward.3} parent=11 // pred_fallthru
        _
      // Predicated region
      $region21: #{pixel_discriminator_forward.3} parent=11 // pred_check
        %p146 = pneg %p99
      $region22: #{pixel_discriminator_forward.3} parent=11 // pred_check_branch
        %148 = sbr.rel (%p146) target = $region24
      $region23: #{pixel_discriminator_forward.3} parent=11 // pred_region
        _
      $region24: #{pixel_discriminator_forward.3} parent=11 // pred_fallthru
        _
    $region12: #{pixel_discriminator_forward.3} parent=5 // pred_fallthru
      _
    %p149 = scmp.lt.s32.totalorder %s10, 2
    // Predicated region
    $region25: #{pixel_discriminator_forward.3} parent=5 // pred_check
      %p150 = pneg %p149
    $region26: #{pixel_discriminator_forward.3} parent=5 // pred_check_branch
      %152 = sbr.rel (%p150) target = $region28
    $region27: #{pixel_discriminator_forward.3} parent=5 // pred_region
      // Predicated region
      $region29: #{pixel_discriminator_forward.3} parent=27 // pred_check
        %p153 = pneg %p30
      $region30: #{pixel_discriminator_forward.3} parent=27 // pred_check_branch
        %155 = sbr.rel (%p153) target = $region32
      $region31: #{pixel_discriminator_forward.3} parent=27 // pred_region
        %s156 = smul.u32 32, %s10
        %p157 = scmp.lt.s32.totalorder %s156, 63
        %s158 = scalar_select %p157, %s156, 63
        %s159 = smul.addr %s158, 4
        %s160 = scalar_lea.vmem %s0, %s159
        %s161 = smul.u32 32, %s10
      $region32: #{pixel_discriminator_forward.3} parent=27 // pred_fallthru
        _
    $region28: #{pixel_discriminator_forward.3} parent=5 // pred_fallthru
      _
    %p162 = scmp.le.s32.totalorder 1, %s10
    %p163 = scmp.lt.s32.totalorder %s10, 3
    %p164 = pnand %p162, %p163
    %p165 = pneg %p164
    // Predicated region
    $region33: #{pixel_discriminator_forward.3} parent=5 // pred_check
      _
    $region34: #{pixel_discriminator_forward.3} parent=5 // pred_check_branch
      %167 = sbr.rel (%p164) target = $region36
    $region35: #{pixel_discriminator_forward.3} parent=5 // pred_region
      %s168 = ssub.s32 %s10, 1
      %s169 = smul.u32 32, %s15
      %p170 = scmp.lt.s32.totalorder %s169, 63
      %s171 = scalar_select %p170, %s169, 63
      %s172 = smul.addr %s171, 4
      %s173 = scalar_lea.vmem %s0, %s172
      %p174 = pneg %p36
      %p175 = pneg %p33
      %p176 = pneg %p57
      %p177 = pneg %p54
      %p178 = pneg %p78
      %p179 = pneg %p75
      %p180 = pneg %p99
      %p181 = pneg %p96
      %p182 = pneg %p125
      %p183 = pneg %p122
      %s184 = smul.u32 32, %s15
      %p185 = scmp.lt.s32.totalorder %s184, 63
      %s186 = scalar_select %p185, %s184, 63
      %s187 = smul.addr %s186, 8
      %s188 = scalar_lea.vmem %s4, %s187
      %s189 = smul.u32 32, %s15
      %p190 = scmp.lt.s32.totalorder %s189, 63
      %s191 = scalar_select %p190, %s189, 63
      %s192 = smul.addr %s191, 4
      %s193 = scalar_lea.vmem %s0, %s192
      %s194 = smul.u32 32, %s15
      %s195 = smul.u32 32, %s15
      %p196 = scmp.lt.s32.totalorder %s195, 63
      %s197 = scalar_select %p196, %s195, 63
      %s198 = smul.addr %s197, 8
      %s199 = scalar_lea.vmem %s4, %s198
      %s200 = smul.u32 32, %s15
      %v202 = vld [vmem:[%s193] sm:$0xf]
      %v203 = vld [vmem:[%s193 + $0x4] sm:$0xf]
      %v204 = vld [vmem:[%s193 + $0x8] sm:$0xf]
      %v205 = vld [vmem:[%s193 + $0xc] sm:$0xf]
      %v206 = vld [vmem:[%s193 + $0x10] sm:$0xf]
      %v207 = vld [vmem:[%s193 + $0x14] sm:$0xf]
      %v208 = vld [vmem:[%s193 + $0x18] sm:$0xf]
      %v209 = vld [vmem:[%s193 + $0x1c] sm:$0xf]
      %v210 = vld [vmem:[%s193 + $0x20] sm:$0xf]
      %v211 = vld [vmem:[%s193 + $0x24] sm:$0xf]
      %v212 = vld [vmem:[%s193 + $0x28] sm:$0xf]
      %v213 = vld [vmem:[%s193 + $0x2c] sm:$0xf]
      %v214 = vld [vmem:[%s193 + $0x30] sm:$0xf]
      %v215 = vld [vmem:[%s193 + $0x34] sm:$0xf]
      %v216 = vld [vmem:[%s193 + $0x38] sm:$0xf]
      %v217 = vld [vmem:[%s193 + $0x3c] sm:$0xf]
      %v218 = vld [vmem:[%s193 + $0x40] sm:$0xf]
      %v219 = vld [vmem:[%s193 + $0x44] sm:$0xf]
      %v220 = vld [vmem:[%s193 + $0x48] sm:$0xf]
      %v221 = vld [vmem:[%s193 + $0x4c] sm:$0xf]
      %v222 = vld [vmem:[%s193 + $0x50] sm:$0xf]
      %v223 = vld [vmem:[%s193 + $0x54] sm:$0xf]
      %v224 = vld [vmem:[%s193 + $0x58] sm:$0xf]
      %v225 = vld [vmem:[%s193 + $0x5c] sm:$0xf]
      %v226 = vld [vmem:[%s193 + $0x60] sm:$0xf]
      %v227 = vld [vmem:[%s193 + $0x64] sm:$0xf]
      %v228 = vld [vmem:[%s193 + $0x68] sm:$0xf]
      %v229 = vld [vmem:[%s193 + $0x6c] sm:$0xf]
      %v230 = vld [vmem:[%s193 + $0x70] sm:$0xf]
      %v231 = vld [vmem:[%s193 + $0x74] sm:$0xf]
      %v232 = vld [vmem:[%s193 + $0x78] sm:$0xf]
      %v233 = vld [vmem:[%s193 + $0x7c] sm:$0xf]
      %v234 = vunpack.c.l.bf16 %v202
      %v235 = vunpack.c.l.bf16 %v203
      %v236 = vunpack.c.l.bf16 %v204
      %v237 = vunpack.c.l.bf16 %v205
      %v238 = vunpack.c.l.bf16 %v206
      %v239 = vunpack.c.l.bf16 %v207
      %v240 = vunpack.c.l.bf16 %v208
      %v241 = vunpack.c.l.bf16 %v209
      %v242 = vunpack.c.l.bf16 %v210
      %v243 = vunpack.c.l.bf16 %v211
      %v244 = vunpack.c.l.bf16 %v212
      %v245 = vunpack.c.l.bf16 %v213
      %v246 = vunpack.c.l.bf16 %v214
      %v247 = vunpack.c.l.bf16 %v215
      %v248 = vunpack.c.l.bf16 %v216
      %v249 = vunpack.c.l.bf16 %v217
      %v250 = vunpack.c.l.bf16 %v218
      %v251 = vunpack.c.l.bf16 %v219
      %v252 = vunpack.c.l.bf16 %v220
      %v253 = vunpack.c.l.bf16 %v221
      %v254 = vunpack.c.l.bf16 %v222
      %v255 = vunpack.c.l.bf16 %v223
      %v256 = vunpack.c.l.bf16 %v224
      %v257 = vunpack.c.l.bf16 %v225
      %v258 = vunpack.c.l.bf16 %v226
      %v259 = vunpack.c.l.bf16 %v227
      %v260 = vunpack.c.l.bf16 %v228
      %v261 = vunpack.c.l.bf16 %v229
      %v262 = vunpack.c.l.bf16 %v230
      %v263 = vunpack.c.l.bf16 %v231
      %v264 = vunpack.c.l.bf16 %v232
      %v265 = vunpack.c.l.bf16 %v233
      %v266 = vld [vmem:[%s1] sm:$0x1]
      %v268 = vlaneseq
      %v269 = vshrl.u32 %v268, 7
      %v270 = vsub.s32 0, %v269
      %v271 = vrot.slane %v266, %v270
      %v273 = vmul.f32 %v234, %v271
      %v274 = vmul.f32 %v235, %v271
      %v275 = vmul.f32 %v236, %v271
      %v276 = vmul.f32 %v237, %v271
      %v277 = vmul.f32 %v238, %v271
      %v278 = vmul.f32 %v239, %v271
      %v279 = vmul.f32 %v240, %v271
      %v280 = vmul.f32 %v241, %v271
      %v281 = vmul.f32 %v242, %v271
      %v282 = vmul.f32 %v243, %v271
      %v283 = vmul.f32 %v244, %v271
      %v284 = vmul.f32 %v245, %v271
      %v285 = vmul.f32 %v246, %v271
      %v286 = vmul.f32 %v247, %v271
      %v287 = vmul.f32 %v248, %v271
      %v288 = vmul.f32 %v249, %v271
      %v289 = vmul.f32 %v250, %v271
      %v290 = vmul.f32 %v251, %v271
      %v291 = vmul.f32 %v252, %v271
      %v292 = vmul.f32 %v253, %v271
      %v293 = vmul.f32 %v254, %v271
      %v294 = vmul.f32 %v255, %v271
      %v295 = vmul.f32 %v256, %v271
      %v296 = vmul.f32 %v257, %v271
      %v297 = vmul.f32 %v258, %v271
      %v298 = vmul.f32 %v259, %v271
      %v299 = vmul.f32 %v260, %v271
      %v300 = vmul.f32 %v261, %v271
      %v301 = vmul.f32 %v262, %v271
      %v302 = vmul.f32 %v263, %v271
      %v303 = vmul.f32 %v264, %v271
      %v304 = vmul.f32 %v265, %v271
      %v305 = vld [vmem:[%s2] sm:$0x1]
      %v307 = vlaneseq
      %v308 = vshrl.u32 %v307, 7
      %v309 = vsub.s32 0, %v308
      %v310 = vrot.slane %v305, %v309
      %v312 = vadd.f32 %v273, %v310
      %v313 = vadd.f32 %v274, %v310
      %v314 = vadd.f32 %v275, %v310
      %v315 = vadd.f32 %v276, %v310
      %v316 = vadd.f32 %v277, %v310
      %v317 = vadd.f32 %v278, %v310
      %v318 = vadd.f32 %v279, %v310
      %v319 = vadd.f32 %v280, %v310
      %v320 = vadd.f32 %v281, %v310
      %v321 = vadd.f32 %v282, %v310
      %v322 = vadd.f32 %v283, %v310
      %v323 = vadd.f32 %v284, %v310
      %v324 = vadd.f32 %v285, %v310
      %v325 = vadd.f32 %v286, %v310
      %v326 = vadd.f32 %v287, %v310
      %v327 = vadd.f32 %v288, %v310
      %v328 = vadd.f32 %v289, %v310
      %v329 = vadd.f32 %v290, %v310
      %v330 = vadd.f32 %v291, %v310
      %v331 = vadd.f32 %v292, %v310
      %v332 = vadd.f32 %v293, %v310
      %v333 = vadd.f32 %v294, %v310
      %v334 = vadd.f32 %v295, %v310
      %v335 = vadd.f32 %v296, %v310
      %v336 = vadd.f32 %v297, %v310
      %v337 = vadd.f32 %v298, %v310
      %v338 = vadd.f32 %v299, %v310
      %v339 = vadd.f32 %v300, %v310
      %v340 = vadd.f32 %v301, %v310
      %v341 = vadd.f32 %v302, %v310
      %v342 = vadd.f32 %v303, %v310
      %v343 = vadd.f32 %v304, %v310
      %v344 = vmul.f32 %v312, 0.2
      %v345 = vmul.f32 %v313, 0.2
      %v346 = vmul.f32 %v314, 0.2
      %v347 = vmul.f32 %v315, 0.2
      %v348 = vmul.f32 %v316, 0.2
      %v349 = vmul.f32 %v317, 0.2
      %v350 = vmul.f32 %v318, 0.2
      %v351 = vmul.f32 %v319, 0.2
      %v352 = vmul.f32 %v320, 0.2
      %v353 = vmul.f32 %v321, 0.2
      %v354 = vmul.f32 %v322, 0.2
      %v355 = vmul.f32 %v323, 0.2
      %v356 = vmul.f32 %v324, 0.2
      %v357 = vmul.f32 %v325, 0.2
      %v358 = vmul.f32 %v326, 0.2
      %v359 = vmul.f32 %v327, 0.2
      %v360 = vmul.f32 %v328, 0.2
      %v361 = vmul.f32 %v329, 0.2
      %v362 = vmul.f32 %v330, 0.2
      %v363 = vmul.f32 %v331, 0.2
      %v364 = vmul.f32 %v332, 0.2
      %v365 = vmul.f32 %v333, 0.2
      %v366 = vmul.f32 %v334, 0.2
      %v367 = vmul.f32 %v335, 0.2
      %v368 = vmul.f32 %v336, 0.2
      %v369 = vmul.f32 %v337, 0.2
      %v370 = vmul.f32 %v338, 0.2
      %v371 = vmul.f32 %v339, 0.2
      %v372 = vmul.f32 %v340, 0.2
      %v373 = vmul.f32 %v341, 0.2
      %v374 = vmul.f32 %v342, 0.2
      %v375 = vmul.f32 %v343, 0.2
      %v376 = vmax.f32 %v312, %v344
      %v377 = vmax.f32 %v313, %v345
      %v378 = vmax.f32 %v314, %v346
      %v379 = vmax.f32 %v315, %v347
      %v380 = vmax.f32 %v316, %v348
      %v381 = vmax.f32 %v317, %v349
      %v382 = vmax.f32 %v318, %v350
      %v383 = vmax.f32 %v319, %v351
      %v384 = vmax.f32 %v320, %v352
      %v385 = vmax.f32 %v321, %v353
      %v386 = vmax.f32 %v322, %v354
      %v387 = vmax.f32 %v323, %v355
      %v388 = vmax.f32 %v324, %v356
      %v389 = vmax.f32 %v325, %v357
      %v390 = vmax.f32 %v326, %v358
      %v391 = vmax.f32 %v327, %v359
      %v392 = vmax.f32 %v328, %v360
      %v393 = vmax.f32 %v329, %v361
      %v394 = vmax.f32 %v330, %v362
      %v395 = vmax.f32 %v331, %v363
      %v396 = vmax.f32 %v332, %v364
      %v397 = vmax.f32 %v333, %v365
      %v398 = vmax.f32 %v334, %v366
      %v399 = vmax.f32 %v335, %v367
      %v400 = vmax.f32 %v336, %v368
      %v401 = vmax.f32 %v337, %v369
      %v402 = vmax.f32 %v338, %v370
      %v403 = vmax.f32 %v339, %v371
      %v404 = vmax.f32 %v340, %v372
      %v405 = vmax.f32 %v341, %v373
      %v406 = vmax.f32 %v342, %v374
      %v407 = vmax.f32 %v343, %v375
      %v408 = vpack.c.bf16 %v377, %v376
      %v409 = vpack.c.bf16 %v379, %v378
      %v410 = vpack.c.bf16 %v381, %v380
      %v411 = vpack.c.bf16 %v383, %v382
      %v412 = vpack.c.bf16 %v385, %v384
      %v413 = vpack.c.bf16 %v387, %v386
      %v414 = vpack.c.bf16 %v389, %v388
      %v415 = vpack.c.bf16 %v391, %v390
      %v416 = vpack.c.bf16 %v393, %v392
      %v417 = vpack.c.bf16 %v395, %v394
      %v418 = vpack.c.bf16 %v397, %v396
      %v419 = vpack.c.bf16 %v399, %v398
      %v420 = vpack.c.bf16 %v401, %v400
      %v421 = vpack.c.bf16 %v403, %v402
      %v422 = vpack.c.bf16 %v405, %v404
      %v423 = vpack.c.bf16 %v407, %v406
      %v424 = vld [vmem:[%s3] sm:$0xf]
      %v425 = vld [vmem:[%s3 + $0x4] sm:$0xf]
      %v426 = vld [vmem:[%s3 + $0x8] sm:$0xf]
      %v427 = vld [vmem:[%s3 + $0xc] sm:$0xf]
      %v428 = vld [vmem:[%s3 + $0x10] sm:$0xf]
      %v429 = vld [vmem:[%s3 + $0x14] sm:$0xf]
      %v430 = vld [vmem:[%s3 + $0x18] sm:$0xf]
      %v431 = vld [vmem:[%s3 + $0x1c] sm:$0xf]
      %v432 = vld [vmem:[%s3 + $0x20] sm:$0xf]
      %v433 = vld [vmem:[%s3 + $0x24] sm:$0xf]
      %v434 = vld [vmem:[%s3 + $0x28] sm:$0xf]
      %v435 = vld [vmem:[%s3 + $0x2c] sm:$0xf]
      %v436 = vld [vmem:[%s3 + $0x30] sm:$0xf]
      %v437 = vld [vmem:[%s3 + $0x34] sm:$0xf]
      %v438 = vld [vmem:[%s3 + $0x38] sm:$0xf]
      %v439 = vld [vmem:[%s3 + $0x3c] sm:$0xf]
      %v456 = vunpack.c.l.b16 %v424
      %v457 = vunpack.c.l.b16 %v425
      %v458 = vunpack.c.l.b16 %v426
      %v459 = vunpack.c.l.b16 %v427
      %v460 = vunpack.c.l.b16 %v428
      %v461 = vunpack.c.l.b16 %v429
      %v462 = vunpack.c.l.b16 %v430
      %v463 = vunpack.c.l.b16 %v431
      %v464 = vunpack.c.l.b16 %v432
      %v465 = vunpack.c.l.b16 %v433
      %v466 = vunpack.c.l.b16 %v434
      %v467 = vunpack.c.l.b16 %v435
      %v468 = vunpack.c.l.b16 %v436
      %v469 = vunpack.c.l.b16 %v437
      %v470 = vunpack.c.l.b16 %v438
      %v471 = vunpack.c.l.b16 %v439
      %v472 = vpack.c.b16 %v457, %v456
      %v473 = vpack.c.b16 %v459, %v458
      %v474 = vpack.c.b16 %v461, %v460
      %v475 = vpack.c.b16 %v463, %v462
      %v476 = vpack.c.b16 %v465, %v464
      %v477 = vpack.c.b16 %v467, %v466
      %v478 = vpack.c.b16 %v469, %v468
      %v479 = vpack.c.b16 %v471, %v470
      %488 = vmatprep.subr.bf16.mxu0 0
      %489 = vmatpush1.bf16.msra.mxu0 %v479
      %490 = vmatprep.subr.bf16.mxu0 0
      %491 = vmatpush1.bf16.msra.mxu0 %v478
      %492 = vmatprep.subr.bf16.mxu0 0
      %493 = vmatpush1.bf16.msra.mxu0 %v477
      %494 = vmatprep.subr.bf16.mxu0 0
      %495 = vmatpush1.bf16.msra.mxu0 %v476
      %496 = vmatprep.subr.bf16.mxu0 0
      %497 = vmatpush1.bf16.msra.mxu0 %v475
      %498 = vmatprep.subr.bf16.mxu0 0
      %499 = vmatpush1.bf16.msra.mxu0 %v474
      %500 = vmatprep.subr.bf16.mxu0 0
      %501 = vmatpush1.bf16.msra.mxu0 %v473
      %502 = vmatprep.subr.bf16.mxu0 0
      %503 = vmatpush1.bf16.msra.mxu0 %v472
      %504 = vmatprep.subr.bf16.mxu0 0
      %505 = vmatpush2.bf16.msra.mxu0 0
      %506 = vmatprep.subr.bf16.mxu0 0
      %507 = vmatpush2.bf16.msra.mxu0 0
      %508 = vmatprep.subr.bf16.mxu0 0
      %509 = vmatpush2.bf16.msra.mxu0 0
      %510 = vmatprep.subr.bf16.mxu0 0
      %511 = vmatpush2.bf16.msra.mxu0 0
      %512 = vmatprep.subr.bf16.mxu0 0
      %513 = vmatpush2.bf16.msra.mxu0 0
      %514 = vmatprep.subr.bf16.mxu0 0
      %515 = vmatpush2.bf16.msra.mxu0 0
      %516 = vmatprep.subr.bf16.mxu0 0
      %517 = vmatpush2.bf16.msra.mxu0 0
      %518 = vmatprep.subr.bf16.mxu0 0
      %519 = vmatpush2.bf16.msra.mxu0 0
      %520 = vmatprep.mubr.bf16.mxu0 0
      %521 = vmatmul.mubr.bf16.gmra.mxu0 %v408
      %v522 = vpop.f32.mrf.mxu0
      %v523 = vadd.f32 0.0, %v522
      %v524 = vpop.f32.mrf.mxu0
      %v525 = vpop.f32.mrf.mxu0
      %v526 = vadd.f32 0.0, %v525
      %v527 = vpop.f32.mrf.mxu0
      %528 = vmatprep.mubr.bf16.mxu0 0
      %529 = vmatmul.mubr.bf16.gmra.mxu0 %v409
      %v530 = vpop.f32.mrf.mxu0
      %v531 = vadd.f32 0.0, %v530
      %v532 = vpop.f32.mrf.mxu0
      %v533 = vpop.f32.mrf.mxu0
      %v534 = vadd.f32 0.0, %v533
      %v535 = vpop.f32.mrf.mxu0
      %536 = vmatprep.mubr.bf16.mxu0 0
      %537 = vmatmul.mubr.bf16.gmra.mxu0 %v410
      %v538 = vpop.f32.mrf.mxu0
      %v539 = vadd.f32 0.0, %v538
      %v540 = vpop.f32.mrf.mxu0
      %v541 = vpop.f32.mrf.mxu0
      %v542 = vadd.f32 0.0, %v541
      %v543 = vpop.f32.mrf.mxu0
      %544 = vmatprep.mubr.bf16.mxu0 0
      %545 = vmatmul.mubr.bf16.gmra.mxu0 %v411
      %v546 = vpop.f32.mrf.mxu0
      %v547 = vadd.f32 0.0, %v546
      %v548 = vpop.f32.mrf.mxu0
      %v549 = vpop.f32.mrf.mxu0
      %v550 = vadd.f32 0.0, %v549
      %v551 = vpop.f32.mrf.mxu0
      %552 = vmatprep.mubr.bf16.mxu0 0
      %553 = vmatmul.mubr.bf16.gmra.mxu0 %v412
      %v554 = vpop.f32.mrf.mxu0
      %v555 = vadd.f32 0.0, %v554
      %v556 = vpop.f32.mrf.mxu0
      %v557 = vpop.f32.mrf.mxu0
      %v558 = vadd.f32 0.0, %v557
      %v559 = vpop.f32.mrf.mxu0
      %560 = vmatprep.mubr.bf16.mxu0 0
      %561 = vmatmul.mubr.bf16.gmra.mxu0 %v413
      %v562 = vpop.f32.mrf.mxu0
      %v563 = vadd.f32 0.0, %v562
      %v564 = vpop.f32.mrf.mxu0
      %v565 = vpop.f32.mrf.mxu0
      %v566 = vadd.f32 0.0, %v565
      %v567 = vpop.f32.mrf.mxu0
      %568 = vmatprep.mubr.bf16.mxu0 0
      %569 = vmatmul.mubr.bf16.gmra.mxu0 %v414
      %v570 = vpop.f32.mrf.mxu0
      %v571 = vadd.f32 0.0, %v570
      %v572 = vpop.f32.mrf.mxu0
      %v573 = vpop.f32.mrf.mxu0
      %v574 = vadd.f32 0.0, %v573
      %v575 = vpop.f32.mrf.mxu0
      %576 = vmatprep.mubr.bf16.mxu0 0
      %577 = vmatmul.mubr.bf16.gmra.mxu0 %v415
      %v578 = vpop.f32.mrf.mxu0
      %v579 = vadd.f32 0.0, %v578
      %v580 = vpop.f32.mrf.mxu0
      %v581 = vpop.f32.mrf.mxu0
      %v582 = vadd.f32 0.0, %v581
      %v583 = vpop.f32.mrf.mxu0
      %584 = vmatprep.mubr.bf16.mxu0 0
      %585 = vmatmul.mubr.bf16.gmra.mxu0 %v416
      %v586 = vpop.f32.mrf.mxu0
      %v587 = vadd.f32 0.0, %v586
      %v588 = vpop.f32.mrf.mxu0
      %v589 = vpop.f32.mrf.mxu0
      %v590 = vadd.f32 0.0, %v589
      %v591 = vpop.f32.mrf.mxu0
      %592 = vmatprep.mubr.bf16.mxu0 0
      %593 = vmatmul.mubr.bf16.gmra.mxu0 %v417
      %v594 = vpop.f32.mrf.mxu0
      %v595 = vadd.f32 0.0, %v594
      %v596 = vpop.f32.mrf.mxu0
      %v597 = vpop.f32.mrf.mxu0
      %v598 = vadd.f32 0.0, %v597
      %v599 = vpop.f32.mrf.mxu0
      %600 = vmatprep.mubr.bf16.mxu0 0
      %601 = vmatmul.mubr.bf16.gmra.mxu0 %v418
      %v602 = vpop.f32.mrf.mxu0
      %v603 = vadd.f32 0.0, %v602
      %v604 = vpop.f32.mrf.mxu0
      %v605 = vpop.f32.mrf.mxu0
      %v606 = vadd.f32 0.0, %v605
      %v607 = vpop.f32.mrf.mxu0
      %608 = vmatprep.mubr.bf16.mxu0 0
      %609 = vmatmul.mubr.bf16.gmra.mxu0 %v419
      %v610 = vpop.f32.mrf.mxu0
      %v611 = vadd.f32 0.0, %v610
      %v612 = vpop.f32.mrf.mxu0
      %v613 = vpop.f32.mrf.mxu0
      %v614 = vadd.f32 0.0, %v613
      %v615 = vpop.f32.mrf.mxu0
      %616 = vmatprep.mubr.bf16.mxu0 0
      %617 = vmatmul.mubr.bf16.gmra.mxu0 %v420
      %v618 = vpop.f32.mrf.mxu0
      %v619 = vadd.f32 0.0, %v618
      %v620 = vpop.f32.mrf.mxu0
      %v621 = vpop.f32.mrf.mxu0
      %v622 = vadd.f32 0.0, %v621
      %v623 = vpop.f32.mrf.mxu0
      %624 = vmatprep.mubr.bf16.mxu0 0
      %625 = vmatmul.mubr.bf16.gmra.mxu0 %v421
      %v626 = vpop.f32.mrf.mxu0
      %v627 = vadd.f32 0.0, %v626
      %v628 = vpop.f32.mrf.mxu0
      %v629 = vpop.f32.mrf.mxu0
      %v630 = vadd.f32 0.0, %v629
      %v631 = vpop.f32.mrf.mxu0
      %632 = vmatprep.mubr.bf16.mxu0 0
      %633 = vmatmul.mubr.bf16.gmra.mxu0 %v422
      %v634 = vpop.f32.mrf.mxu0
      %v635 = vadd.f32 0.0, %v634
      %v636 = vpop.f32.mrf.mxu0
      %v637 = vpop.f32.mrf.mxu0
      %v638 = vadd.f32 0.0, %v637
      %v639 = vpop.f32.mrf.mxu0
      %640 = vmatprep.mubr.bf16.mxu0 0
      %641 = vmatmul.mubr.bf16.gmra.mxu0 %v423
      %v642 = vpop.f32.mrf.mxu0
      %v643 = vadd.f32 0.0, %v642
      %v644 = vpop.f32.mrf.mxu0
      %v645 = vpop.f32.mrf.mxu0
      %v646 = vadd.f32 0.0, %v645
      %v647 = vpop.f32.mrf.mxu0
      %648 = vdwg.mxu0
      %649 = vst [vmem:[%s199] sm:$0xff] %v523
      %650 = vst [vmem:[%s199 + $0x8] sm:$0xff] %v526
      %651 = vst [vmem:[%s199 + $0x10] sm:$0xff] %v531
      %652 = vst [vmem:[%s199 + $0x18] sm:$0xff] %v534
      %653 = vst [vmem:[%s199 + $0x20] sm:$0xff] %v539
      %654 = vst [vmem:[%s199 + $0x28] sm:$0xff] %v542
      %655 = vst [vmem:[%s199 + $0x30] sm:$0xff] %v547
      %656 = vst [vmem:[%s199 + $0x38] sm:$0xff] %v550
      %657 = vst [vmem:[%s199 + $0x40] sm:$0xff] %v555
      %658 = vst [vmem:[%s199 + $0x48] sm:$0xff] %v558
      %659 = vst [vmem:[%s199 + $0x50] sm:$0xff] %v563
      %660 = vst [vmem:[%s199 + $0x58] sm:$0xff] %v566
      %661 = vst [vmem:[%s199 + $0x60] sm:$0xff] %v571
      %662 = vst [vmem:[%s199 + $0x68] sm:$0xff] %v574
      %663 = vst [vmem:[%s199 + $0x70] sm:$0xff] %v579
      %664 = vst [vmem:[%s199 + $0x78] sm:$0xff] %v582
      %665 = vst [vmem:[%s199 + $0x80] sm:$0xff] %v587
      %666 = vst [vmem:[%s199 + $0x88] sm:$0xff] %v590
      %667 = vst [vmem:[%s199 + $0x90] sm:$0xff] %v595
      %668 = vst [vmem:[%s199 + $0x98] sm:$0xff] %v598
      %669 = vst [vmem:[%s199 + $0xa0] sm:$0xff] %v603
      %670 = vst [vmem:[%s199 + $0xa8] sm:$0xff] %v606
      %671 = vst [vmem:[%s199 + $0xb0] sm:$0xff] %v611
      %672 = vst [vmem:[%s199 + $0xb8] sm:$0xff] %v614
      %673 = vst [vmem:[%s199 + $0xc0] sm:$0xff] %v619
      %674 = vst [vmem:[%s199 + $0xc8] sm:$0xff] %v622
      %675 = vst [vmem:[%s199 + $0xd0] sm:$0xff] %v627
      %676 = vst [vmem:[%s199 + $0xd8] sm:$0xff] %v630
      %677 = vst [vmem:[%s199 + $0xe0] sm:$0xff] %v635
      %678 = vst [vmem:[%s199 + $0xe8] sm:$0xff] %v638
      %679 = vst [vmem:[%s199 + $0xf0] sm:$0xff] %v643
      %680 = vst [vmem:[%s199 + $0xf8] sm:$0xff] %v646
      %s681 = smul.u32 32, %s15
      %p682 = scmp.lt.s32.totalorder %s681, 63
      %s683 = scalar_select %p682, %s681, 63
      %s684 = smul.addr %s683, 8
      %s685 = scalar_lea.vmem %s4, %s684
      // Predicated region
      $region37: #{pixel_discriminator_forward.3} parent=35 // pred_check
        %p686 = pneg %p122
      $region38: #{pixel_discriminator_forward.3} parent=35 // pred_check_branch
        %688 = sbr.rel (%p686) target = $region40
      $region39: #{pixel_discriminator_forward.3} parent=35 // pred_region
        %s689 = smul.u32 32, %s15
      $region40: #{pixel_discriminator_forward.3} parent=35 // pred_fallthru
        _
    $region36: #{pixel_discriminator_forward.3} parent=5 // pred_fallthru
      _
    %p690 = scmp.le.s32.totalorder 2, %s10
    // Predicated region
    $region41: #{pixel_discriminator_forward.3} parent=5 // pred_check
      %p691 = pneg %p690
    $region42: #{pixel_discriminator_forward.3} parent=5 // pred_check_branch
      %693 = sbr.rel (%p691) target = $region44
    $region43: #{pixel_discriminator_forward.3} parent=5 // pred_region
      %s694 = ssub.s32 %s10, 2
      // Predicated region
      $region45: #{pixel_discriminator_forward.3} parent=43 // pred_check
        %p695 = pneg %p128
      $region46: #{pixel_discriminator_forward.3} parent=43 // pred_check_branch
        %697 = sbr.rel (%p695) target = $region48
      $region47: #{pixel_discriminator_forward.3} parent=43 // pred_region
        %s698 = smul.u32 32, %s16
        %p699 = scmp.lt.s32.totalorder %s698, 63
        %s700 = scalar_select %p699, %s698, 63
        %s701 = smul.addr %s700, 8
        %s702 = scalar_lea.vmem %s4, %s701
      $region48: #{pixel_discriminator_forward.3} parent=43 // pred_fallthru
        _
    $region44: #{pixel_discriminator_forward.3} parent=5 // pred_fallthru
      _
  $region6: #{pixel_discriminator_forward.3} parent=0 // loop_footer
    %s14 = sadd.s32 1, %s10
  $region7: #{pixel_discriminator_forward.3} parent=0 // loop_footer_branch
    %9 = sbr.rel target = $region3
  $region8: #{pixel_discriminator_forward.3} parent=0 // loop_exit
    _

// kernel: pixel_discriminator_forward.2
$region0: #{pixel_discriminator_forward.2}
  #allocation0 [shape = 'u32[]', space=smem, size = 0x4, offset = 0x4, fixed_abs, tag = 'smem constant byte address 0x4 - core index']
  #allocation1 [shape = 'u32[144,128]{1,0:T(1,128)}', space=vmem, size = 0x12000, scoped, tag = 'internal scratch']
  %s0 = inlined_call_operand.vmem [shape: bf16[512,128], index: 0, kind: input, shape index: {}]
  %s1 = inlined_call_operand.vmem [shape: bf16[128,128], index: 1, kind: input, shape index: {}]
  %s2 = inlined_call_operand.vmem [shape: f32[1,128], index: 2, kind: input, shape index: {}]
  %s3 = inlined_call_operand.vmem [shape: bf16[128,128], index: 3, kind: input, shape index: {}]
  %s4 = inlined_call_operand.vmem [shape: bf16[512,128], index: 4, kind: output, shape index: {0}]
  %s5 = inlined_call_operand.vmem [shape: f32[2,8,128], index: 5, kind: output, shape index: {1}]
  %6 = xla_tuple %s4, %s5
  %s7 = sld [smem:[#allocation0]]
  $region57: #{pixel_discriminator_forward.2} parent=0
    _
  %s9 = ssub.s32 1, %s7
  %s10 = scalar_select 0, %s9, %s7
  loop: start=0, step=1, limit=4
  $region2: #{pixel_discriminator_forward.2} parent=0 // loop_pre_header
    _
  $region3: #{pixel_discriminator_forward.2} parent=0 // loop_header
    %s12 = sphi 0, %s16
    %p13 = scmp.ge.s32.totalorder %s12, 4
    %s22 = sphi 0, %s24
    %s25 = sphi 0, %s22
    %s26 = sphi 0, %s25
    %s42 = sphi 0, %s26
    %s46 = sphi 0, %s46
    %s48 = sphi 0, %s46
    %s49 = sphi 0, %s48
    %s63 = sphi 0, %s49
    %s67 = sphi 0, %s67
    %s69 = sphi 0, %s67
    %s70 = sphi 0, %s69
    %s84 = sphi 0, %s70
    %s88 = sphi 0, %s88
    %s90 = sphi 0, %s88
    %s91 = sphi 0, %s90
    %s105 = sphi 0, %s91
    %s111 = sphi 0, %s113
    %s114 = sphi 0, %s111
    %s115 = sphi 0, %s114
    %s131 = sphi 0, %s115
    %s137 = sphi 0, %s139
    %s140 = sphi 0, %s137
    %s141 = sphi 0, %s140
    %s157 = sphi 0, %s141
  $region4: #{pixel_discriminator_forward.2} parent=0 // loop_header_branch
    %15 = sbr.rel (%p13) target = $region8
  $region5: #{pixel_discriminator_forward.2} parent=0 // loop_body
    %s17 = ssub.s32 %s12, 1
    %s18 = ssub.s32 %s12, 2
    %s19 = sadd.s32 %s12, 1
    %s20 = ssub.s32 %s12, %s19
    %p21 = scmp.eq.s32.totalorder %s20, 0
    %s23 = sadd.s32 %s22, 1
    %s24 = scalar_select %p21, %s22, %s23
    %p27 = pneg %p21
    %p28 = scmp.eq.s32.totalorder %s12, 1
    %p29 = por %p27, %p28
    %p30 = scmp.ne.s32.totalorder %s22, %s25
    %p31 = scmp.eq.s32.totalorder %s12, 0
    %p32 = por %p30, %p31
    %p33 = scmp.ne.s32.totalorder %s22, %s25
    %p34 = scmp.eq.s32.totalorder %s17, 1
    %p35 = por %p33, %p34
    %p36 = scmp.ne.s32.totalorder %s25, %s26
    %p37 = scmp.eq.s32.totalorder %s17, 0
    %p38 = por %p36, %p37
    %p39 = scmp.ne.s32.totalorder %s25, %s26
    %p40 = scmp.eq.s32.totalorder %s18, 1
    %p41 = por %p39, %p40
    %p43 = scmp.ne.s32.totalorder %s26, %s42
    %p44 = scmp.eq.s32.totalorder %s18, 0
    %p45 = por %p43, %p44
    %s47 = sadd.s32 %s46, 1
    %p50 = scmp.eq.s32.totalorder %s12, 1
    %p51 = scmp.ne.s32.totalorder %s46, %s48
    %p52 = scmp.eq.s32.totalorder %s12, 0
    %p53 = por %p51, %p52
    %p54 = scmp.ne.s32.totalorder %s46, %s48
    %p55 = scmp.eq.s32.totalorder %s17, 1
    %p56 = por %p54, %p55
    %p57 = scmp.ne.s32.totalorder %s48, %s49
    %p58 = scmp.eq.s32.totalorder %s17, 0
    %p59 = por %p57, %p58
    %p60 = scmp.ne.s32.totalorder %s48, %s49
    %p61 = scmp.eq.s32.totalorder %s18, 1
    %p62 = por %p60, %p61
    %p64 = scmp.ne.s32.totalorder %s49, %s63
    %p65 = scmp.eq.s32.totalorder %s18, 0
    %p66 = por %p64, %p65
    %s68 = sadd.s32 %s67, 1
    %p71 = scmp.eq.s32.totalorder %s12, 1
    %p72 = scmp.ne.s32.totalorder %s67, %s69
    %p73 = scmp.eq.s32.totalorder %s12, 0
    %p74 = por %p72, %p73
    %p75 = scmp.ne.s32.totalorder %s67, %s69
    %p76 = scmp.eq.s32.totalorder %s17, 1
    %p77 = por %p75, %p76
    %p78 = scmp.ne.s32.totalorder %s69, %s70
    %p79 = scmp.eq.s32.totalorder %s17, 0
    %p80 = por %p78, %p79
    %p81 = scmp.ne.s32.totalorder %s69, %s70
    %p82 = scmp.eq.s32.totalorder %s18, 1
    %p83 = por %p81, %p82
    %p85 = scmp.ne.s32.totalorder %s70, %s84
    %p86 = scmp.eq.s32.totalorder %s18, 0
    %p87 = por %p85, %p86
    %s89 = sadd.s32 %s88, 1
    %p92 = scmp.eq.s32.totalorder %s12, 1
    %p93 = scmp.ne.s32.totalorder %s88, %s90
    %p94 = scmp.eq.s32.totalorder %s12, 0
    %p95 = por %p93, %p94
    %p96 = scmp.ne.s32.totalorder %s88, %s90
    %p97 = scmp.eq.s32.totalorder %s17, 1
    %p98 = por %p96, %p97
    %p99 = scmp.ne.s32.totalorder %s90, %s91
    %p100 = scmp.eq.s32.totalorder %s17, 0
    %p101 = por %p99, %p100
    %p102 = scmp.ne.s32.totalorder %s90, %s91
    %p103 = scmp.eq.s32.totalorder %s18, 1
    %p104 = por %p102, %p103
    %p106 = scmp.ne.s32.totalorder %s91, %s105
    %p107 = scmp.eq.s32.totalorder %s18, 0
    %p108 = por %p106, %p107
    %s109 = ssub.s32 %s12, %s19
    %p110 = scmp.eq.s32.totalorder %s109, 0
    %s112 = sadd.s32 %s111, 1
    %s113 = scalar_select %p110, %s111, %s112
    %p116 = pneg %p110
    %p117 = scmp.eq.s32.totalorder %s12, 1
    %p118 = por %p116, %p117
    %p119 = scmp.ne.s32.totalorder %s111, %s114
    %p120 = scmp.eq.s32.totalorder %s12, 0
    %p121 = por %p119, %p120
    %p122 = scmp.ne.s32.totalorder %s111, %s114
    %p123 = scmp.eq.s32.totalorder %s17, 1
    %p124 = por %p122, %p123
    %p125 = scmp.ne.s32.totalorder %s114, %s115
    %p126 = scmp.eq.s32.totalorder %s17, 0
    %p127 = por %p125, %p126
    %p128 = scmp.ne.s32.totalorder %s114, %s115
    %p129 = scmp.eq.s32.totalorder %s18, 1
    %p130 = por %p128, %p129
    %p132 = scmp.ne.s32.totalorder %s115, %s131
    %p133 = scmp.eq.s32.totalorder %s18, 0
    %p134 = por %p132, %p133
    %s135 = ssub.s32 %s12, %s19
    %p136 = scmp.eq.s32.totalorder %s135, 0
    %s138 = sadd.s32 %s137, 1
    %s139 = scalar_select %p136, %s137, %s138
    %p142 = pneg %p136
    %p143 = scmp.eq.s32.totalorder %s12, 1
    %p144 = por %p142, %p143
    %p145 = scmp.ne.s32.totalorder %s137, %s140
    %p146 = scmp.eq.s32.totalorder %s12, 0
    %p147 = por %p145, %p146
    %p148 = scmp.ne.s32.totalorder %s137, %s140
    %p149 = scmp.eq.s32.totalorder %s17, 1
    %p150 = por %p148, %p149
    %p151 = scmp.ne.s32.totalorder %s140, %s141
    %p152 = scmp.eq.s32.totalorder %s17, 0
    %p153 = por %p151, %p152
    %p154 = scmp.ne.s32.totalorder %s140, %s141
    %p155 = scmp.eq.s32.totalorder %s18, 1
    %p156 = por %p154, %p155
    %p158 = scmp.ne.s32.totalorder %s141, %s157
    %p159 = scmp.eq.s32.totalorder %s18, 0
    %p160 = por %p158, %p159
    %p161 = scmp.le.s32.totalorder 1, %s12
    %p162 = scmp.lt.s32.totalorder %s12, 3
    %p163 = pnand %p161, %p162
    %p164 = pneg %p163
    // Predicated region
    $region9: #{pixel_discriminator_forward.2} parent=5 // pred_check
      _
    $region10: #{pixel_discriminator_forward.2} parent=5 // pred_check_branch
      %166 = sbr.rel (%p163) target = $region12
    $region11: #{pixel_discriminator_forward.2} parent=5 // pred_region
      %s167 = ssub.s32 %s12, 1
      // Predicated region
      $region13: #{pixel_discriminator_forward.2} parent=11 // pred_check
        %p168 = pneg %p59
      $region14: #{pixel_discriminator_forward.2} parent=11 // pred_check_branch
        %170 = sbr.rel (%p168) target = $region16
      $region15: #{pixel_discriminator_forward.2} parent=11 // pred_region
        _
      $region16: #{pixel_discriminator_forward.2} parent=11 // pred_fallthru
        _
      // Predicated region
      $region17: #{pixel_discriminator_forward.2} parent=11 // pred_check
        %p171 = pneg %p80
      $region18: #{pixel_discriminator_forward.2} parent=11 // pred_check_branch
        %173 = sbr.rel (%p171) target = $region20
      $region19: #{pixel_discriminator_forward.2} parent=11 // pred_region
        _
      $region20: #{pixel_discriminator_forward.2} parent=11 // pred_fallthru
        _
      // Predicated region
      $region21: #{pixel_discriminator_forward.2} parent=11 // pred_check
        %p174 = pneg %p101
      $region22: #{pixel_discriminator_forward.2} parent=11 // pred_check_branch
        %176 = sbr.rel (%p174) target = $region24
      $region23: #{pixel_discriminator_forward.2} parent=11 // pred_region
        _
      $region24: #{pixel_discriminator_forward.2} parent=11 // pred_fallthru
        _
    $region12: #{pixel_discriminator_forward.2} parent=5 // pred_fallthru
      _
    %p177 = scmp.lt.s32.totalorder %s12, 2
    // Predicated region
    $region25: #{pixel_discriminator_forward.2} parent=5 // pred_check
      %p178 = pneg %p177
    $region26: #{pixel_discriminator_forward.2} parent=5 // pred_check_branch
      %180 = sbr.rel (%p178) target = $region28
    $region27: #{pixel_discriminator_forward.2} parent=5 // pred_region
      // Predicated region
      $region29: #{pixel_discriminator_forward.2} parent=27 // pred_check
        %p181 = pneg %p32
      $region30: #{pixel_discriminator_forward.2} parent=27 // pred_check_branch
        %183 = sbr.rel (%p181) target = $region32
      $region31: #{pixel_discriminator_forward.2} parent=27 // pred_region
        %s184 = smul.u32 32, %s12
        %p185 = scmp.lt.s32.totalorder %s184, 63
        %s186 = scalar_select %p185, %s184, 63
        %s187 = smul.addr %s186, 4
        %s188 = scalar_lea.vmem %s0, %s187
        %s189 = smul.u32 32, %s12
      $region32: #{pixel_discriminator_forward.2} parent=27 // pred_fallthru
        _
    $region28: #{pixel_discriminator_forward.2} parent=5 // pred_fallthru
      _
    %p190 = scmp.le.s32.totalorder 1, %s12
    %p191 = scmp.lt.s32.totalorder %s12, 3
    %p192 = pnand %p190, %p191
    %p193 = pneg %p192
    // Predicated region
    $region33: #{pixel_discriminator_forward.2} parent=5 // pred_check
      _
    $region34: #{pixel_discriminator_forward.2} parent=5 // pred_check_branch
      %195 = sbr.rel (%p192) target = $region36
    $region35: #{pixel_discriminator_forward.2} parent=5 // pred_region
      %s196 = ssub.s32 %s12, 1
      %s197 = smul.u32 32, %s17
      %p198 = scmp.lt.s32.totalorder %s197, 63
      %s199 = scalar_select %p198, %s197, 63
      %s200 = smul.addr %s199, 4
      %s201 = scalar_lea.vmem %s0, %s200
      %p202 = pneg %p38
      %p203 = pneg %p35
      %p204 = pneg %p59
      %p205 = pneg %p56
      %p206 = pneg %p80
      %p207 = pneg %p77
      %p208 = pneg %p101
      %p209 = pneg %p98
      %p210 = pneg %p127
      %p211 = pneg %p124
      %s212 = smul.u32 32, %s17
      %p213 = scmp.lt.s32.totalorder %s212, 63
      %s214 = scalar_select %p213, %s212, 63
      %s215 = smul.addr %s214, 4
      %s216 = scalar_lea.vmem %s4, %s215
      %p217 = pneg %p153
      %p218 = pneg %p150
      %p219 = scmp.lt.s32.totalorder %s17, 1
      %s220 = scalar_select %p219, %s17, 1
      %s221 = smul.addr %s220, 8
      %s222 = scalar_lea.vmem %s5, %s221
      %s223 = smul.u32 32, %s17
      %p224 = scmp.lt.s32.totalorder %s223, 63
      %s225 = scalar_select %p224, %s223, 63
      %s226 = smul.addr %s225, 4
      %s227 = scalar_lea.vmem %s0, %s226
      %s228 = smul.u32 32, %s17
      %s229 = smul.u32 32, %s17
      %p230 = scmp.lt.s32.totalorder %s229, 63
      %s231 = scalar_select %p230, %s229, 63
      %s232 = smul.addr %s231, 4
      %s233 = scalar_lea.vmem %s4, %s232
      %s234 = smul.u32 32, %s17
      %p235 = scmp.lt.s32.totalorder %s17, 1
      %s236 = scalar_select %p235, %s17, 1
      %s237 = smul.addr %s236, 8
      %s238 = scalar_lea.vmem %s5, %s237
      %v240 = vld [vmem:[%s227] sm:$0xf]
      %v241 = vld [vmem:[%s227 + $0x4] sm:$0xf]
      %v242 = vld [vmem:[%s227 + $0x8] sm:$0xf]
      %v243 = vld [vmem:[%s227 + $0xc] sm:$0xf]
      %v244 = vld [vmem:[%s227 + $0x10] sm:$0xf]
      %v245 = vld [vmem:[%s227 + $0x14] sm:$0xf]
      %v246 = vld [vmem:[%s227 + $0x18] sm:$0xf]
      %v247 = vld [vmem:[%s227 + $0x1c] sm:$0xf]
      %v248 = vld [vmem:[%s227 + $0x20] sm:$0xf]
      %v249 = vld [vmem:[%s227 + $0x24] sm:$0xf]
      %v250 = vld [vmem:[%s227 + $0x28] sm:$0xf]
      %v251 = vld [vmem:[%s227 + $0x2c] sm:$0xf]
      %v252 = vld [vmem:[%s227 + $0x30] sm:$0xf]
      %v253 = vld [vmem:[%s227 + $0x34] sm:$0xf]
      %v254 = vld [vmem:[%s227 + $0x38] sm:$0xf]
      %v255 = vld [vmem:[%s227 + $0x3c] sm:$0xf]
      %v256 = vld [vmem:[%s227 + $0x40] sm:$0xf]
      %v257 = vld [vmem:[%s227 + $0x44] sm:$0xf]
      %v258 = vld [vmem:[%s227 + $0x48] sm:$0xf]
      %v259 = vld [vmem:[%s227 + $0x4c] sm:$0xf]
      %v260 = vld [vmem:[%s227 + $0x50] sm:$0xf]
      %v261 = vld [vmem:[%s227 + $0x54] sm:$0xf]
      %v262 = vld [vmem:[%s227 + $0x58] sm:$0xf]
      %v263 = vld [vmem:[%s227 + $0x5c] sm:$0xf]
      %v264 = vld [vmem:[%s227 + $0x60] sm:$0xf]
      %v265 = vld [vmem:[%s227 + $0x64] sm:$0xf]
      %v266 = vld [vmem:[%s227 + $0x68] sm:$0xf]
      %v267 = vld [vmem:[%s227 + $0x6c] sm:$0xf]
      %v268 = vld [vmem:[%s227 + $0x70] sm:$0xf]
      %v269 = vld [vmem:[%s227 + $0x74] sm:$0xf]
      %v270 = vld [vmem:[%s227 + $0x78] sm:$0xf]
      %v271 = vld [vmem:[%s227 + $0x7c] sm:$0xf]
      %v272 = vld [vmem:[%s1] sm:$0xf]
      %v273 = vld [vmem:[%s1 + $0x4] sm:$0xf]
      %v274 = vld [vmem:[%s1 + $0x8] sm:$0xf]
      %v275 = vld [vmem:[%s1 + $0xc] sm:$0xf]
      %v276 = vld [vmem:[%s1 + $0x10] sm:$0xf]
      %v277 = vld [vmem:[%s1 + $0x14] sm:$0xf]
      %v278 = vld [vmem:[%s1 + $0x18] sm:$0xf]
      %v279 = vld [vmem:[%s1 + $0x1c] sm:$0xf]
      %v280 = vld [vmem:[%s1 + $0x20] sm:$0xf]
      %v281 = vld [vmem:[%s1 + $0x24] sm:$0xf]
      %v282 = vld [vmem:[%s1 + $0x28] sm:$0xf]
      %v283 = vld [vmem:[%s1 + $0x2c] sm:$0xf]
      %v284 = vld [vmem:[%s1 + $0x30] sm:$0xf]
      %v285 = vld [vmem:[%s1 + $0x34] sm:$0xf]
      %v286 = vld [vmem:[%s1 + $0x38] sm:$0xf]
      %v287 = vld [vmem:[%s1 + $0x3c] sm:$0xf]
      %v288 = vld [vmem:[%s2] sm:$0x1]
      %v290 = vlaneseq
      %v291 = vshrl.u32 %v290, 7
      %v292 = vsub.s32 0, %v291
      %v293 = vrot.slane %v288, %v292
      %v327 = vunpack.c.l.b16 %v240
      %v328 = vunpack.c.l.b16 %v241
      %v329 = vunpack.c.l.b16 %v242
      %v330 = vunpack.c.l.b16 %v243
      %v331 = vunpack.c.l.b16 %v244
      %v332 = vunpack.c.l.b16 %v245
      %v333 = vunpack.c.l.b16 %v246
      %v334 = vunpack.c.l.b16 %v247
      %v335 = vunpack.c.l.b16 %v248
      %v336 = vunpack.c.l.b16 %v249
      %v337 = vunpack.c.l.b16 %v250
      %v338 = vunpack.c.l.b16 %v251
      %v339 = vunpack.c.l.b16 %v252
      %v340 = vunpack.c.l.b16 %v253
      %v341 = vunpack.c.l.b16 %v254
      %v342 = vunpack.c.l.b16 %v255
      %v343 = vunpack.c.l.b16 %v256
      %v344 = vunpack.c.l.b16 %v257
      %v345 = vunpack.c.l.b16 %v258
      %v346 = vunpack.c.l.b16 %v259
      %v347 = vunpack.c.l.b16 %v260
      %v348 = vunpack.c.l.b16 %v261
      %v349 = vunpack.c.l.b16 %v262
      %v350 = vunpack.c.l.b16 %v263
      %v351 = vunpack.c.l.b16 %v264
      %v352 = vunpack.c.l.b16 %v265
      %v353 = vunpack.c.l.b16 %v266
      %v354 = vunpack.c.l.b16 %v267
      %v355 = vunpack.c.l.b16 %v268
      %v356 = vunpack.c.l.b16 %v269
      %v357 = vunpack.c.l.b16 %v270
      %v358 = vunpack.c.l.b16 %v271
      %v359 = vpack.c.b16 %v328, %v327
      %v360 = vpack.c.b16 %v330, %v329
      %v361 = vpack.c.b16 %v332, %v331
      %v362 = vpack.c.b16 %v334, %v333
      %v363 = vpack.c.b16 %v336, %v335
      %v364 = vpack.c.b16 %v338, %v337
      %v365 = vpack.c.b16 %v340, %v339
      %v366 = vpack.c.b16 %v342, %v341
      %v367 = vpack.c.b16 %v344, %v343
      %v368 = vpack.c.b16 %v346, %v345
      %v369 = vpack.c.b16 %v348, %v347
      %v370 = vpack.c.b16 %v350, %v349
      %v371 = vpack.c.b16 %v352, %v351
      %v372 = vpack.c.b16 %v354, %v353
      %v373 = vpack.c.b16 %v356, %v355
      %v374 = vpack.c.b16 %v358, %v357
      %v407 = vunpack.c.l.b16 %v272
      %v408 = vunpack.c.l.b16 %v273
      %v409 = vunpack.c.l.b16 %v274
      %v410 = vunpack.c.l.b16 %v275
      %v411 = vunpack.c.l.b16 %v276
      %v412 = vunpack.c.l.b16 %v277
      %v413 = vunpack.c.l.b16 %v278
      %v414 = vunpack.c.l.b16 %v279
      %v415 = vunpack.c.l.b16 %v280
      %v416 = vunpack.c.l.b16 %v281
      %v417 = vunpack.c.l.b16 %v282
      %v418 = vunpack.c.l.b16 %v283
      %v419 = vunpack.c.l.b16 %v284
      %v420 = vunpack.c.l.b16 %v285
      %v421 = vunpack.c.l.b16 %v286
      %v422 = vunpack.c.l.b16 %v287
      %v423 = vpack.c.b16 %v408, %v407
      %v424 = vpack.c.b16 %v410, %v409
      %v425 = vpack.c.b16 %v412, %v411
      %v426 = vpack.c.b16 %v414, %v413
      %v427 = vpack.c.b16 %v416, %v415
      %v428 = vpack.c.b16 %v418, %v417
      %v429 = vpack.c.b16 %v420, %v419
      %v430 = vpack.c.b16 %v422, %v421
      %439 = vmatprep.subr.bf16.mxu0 0
      %440 = vmatpush1.bf16.msra.mxu0 %v430
      %441 = vmatprep.subr.bf16.mxu0 0
      %442 = vmatpush1.bf16.msra.mxu0 %v429
      %443 = vmatprep.subr.bf16.mxu0 0
      %444 = vmatpush1.bf16.msra.mxu0 %v428
      %445 = vmatprep.subr.bf16.mxu0 0
      %446 = vmatpush1.bf16.msra.mxu0 %v427
      %447 = vmatprep.subr.bf16.mxu0 0
      %448 = vmatpush1.bf16.msra.mxu0 %v426
      %449 = vmatprep.subr.bf16.mxu0 0
      %450 = vmatpush1.bf16.msra.mxu0 %v425
      %451 = vmatprep.subr.bf16.mxu0 0
      %452 = vmatpush1.bf16.msra.mxu0 %v424
      %453 = vmatprep.subr.bf16.mxu0 0
      %454 = vmatpush1.bf16.msra.mxu0 %v423
      %455 = vmatprep.subr.bf16.mxu0 0
      %456 = vmatpush2.bf16.msra.mxu0 0
      %457 = vmatprep.subr.bf16.mxu0 0
      %458 = vmatpush2.bf16.msra.mxu0 0
      %459 = vmatprep.subr.bf16.mxu0 0
      %460 = vmatpush2.bf16.msra.mxu0 0
      %461 = vmatprep.subr.bf16.mxu0 0
      %462 = vmatpush2.bf16.msra.mxu0 0
      %463 = vmatprep.subr.bf16.mxu0 0
      %464 = vmatpush2.bf16.msra.mxu0 0
      %465 = vmatprep.subr.bf16.mxu0 0
      %466 = vmatpush2.bf16.msra.mxu0 0
      %467 = vmatprep.subr.bf16.mxu0 0
      %468 = vmatpush2.bf16.msra.mxu0 0
      %469 = vmatprep.subr.bf16.mxu0 0
      %470 = vmatpush2.bf16.msra.mxu0 0
      %471 = vmatprep.mubr.bf16.mxu0 0
      %472 = vmatmul.mubr.bf16.gmra.mxu0 %v359
      %v473 = vpop.f32.mrf.mxu0
      %v474 = vadd.f32 %v293, %v473
      %v475 = vpop.f32.mrf.mxu0
      %v476 = vpop.f32.mrf.mxu0
      %v477 = vadd.f32 %v293, %v476
      %v478 = vpop.f32.mrf.mxu0
      %479 = vmatprep.mubr.bf16.mxu0 0
      %480 = vmatmul.mubr.bf16.gmra.mxu0 %v360
      %v481 = vpop.f32.mrf.mxu0
      %v482 = vadd.f32 %v293, %v481
      %v483 = vpop.f32.mrf.mxu0
      %v484 = vpop.f32.mrf.mxu0
      %v485 = vadd.f32 %v293, %v484
      %v486 = vpop.f32.mrf.mxu0
      %487 = vmatprep.mubr.bf16.mxu0 0
      %488 = vmatmul.mubr.bf16.gmra.mxu0 %v361
      %v489 = vpop.f32.mrf.mxu0
      %v490 = vadd.f32 %v293, %v489
      %v491 = vpop.f32.mrf.mxu0
      %v492 = vpop.f32.mrf.mxu0
      %v493 = vadd.f32 %v293, %v492
      %v494 = vpop.f32.mrf.mxu0
      %495 = vmatprep.mubr.bf16.mxu0 0
      %496 = vmatmul.mubr.bf16.gmra.mxu0 %v362
      %v497 = vpop.f32.mrf.mxu0
      %v498 = vadd.f32 %v293, %v497
      %v499 = vpop.f32.mrf.mxu0
      %v500 = vpop.f32.mrf.mxu0
      %v501 = vadd.f32 %v293, %v500
      %v502 = vpop.f32.mrf.mxu0
      %503 = vmatprep.mubr.bf16.mxu0 0
      %504 = vmatmul.mubr.bf16.gmra.mxu0 %v363
      %v505 = vpop.f32.mrf.mxu0
      %v506 = vadd.f32 %v293, %v505
      %v507 = vpop.f32.mrf.mxu0
      %v508 = vpop.f32.mrf.mxu0
      %v509 = vadd.f32 %v293, %v508
      %v510 = vpop.f32.mrf.mxu0
      %511 = vmatprep.mubr.bf16.mxu0 0
      %512 = vmatmul.mubr.bf16.gmra.mxu0 %v364
      %v513 = vpop.f32.mrf.mxu0
      %v514 = vadd.f32 %v293, %v513
      %v515 = vpop.f32.mrf.mxu0
      %v516 = vpop.f32.mrf.mxu0
      %v517 = vadd.f32 %v293, %v516
      %v518 = vpop.f32.mrf.mxu0
      %519 = vmatprep.mubr.bf16.mxu0 0
      %520 = vmatmul.mubr.bf16.gmra.mxu0 %v365
      %v521 = vpop.f32.mrf.mxu0
      %v522 = vadd.f32 %v293, %v521
      %v523 = vpop.f32.mrf.mxu0
      %v524 = vpop.f32.mrf.mxu0
      %v525 = vadd.f32 %v293, %v524
      %v526 = vpop.f32.mrf.mxu0
      %527 = vmatprep.mubr.bf16.mxu0 0
      %528 = vmatmul.mubr.bf16.gmra.mxu0 %v366
      %v529 = vpop.f32.mrf.mxu0
      %v530 = vadd.f32 %v293, %v529
      %v531 = vpop.f32.mrf.mxu0
      %v532 = vpop.f32.mrf.mxu0
      %v533 = vadd.f32 %v293, %v532
      %v534 = vpop.f32.mrf.mxu0
      %535 = vmatprep.mubr.bf16.mxu0 0
      %536 = vmatmul.mubr.bf16.gmra.mxu0 %v367
      %v537 = vpop.f32.mrf.mxu0
      %v538 = vadd.f32 %v293, %v537
      %v539 = vpop.f32.mrf.mxu0
      %v540 = vpop.f32.mrf.mxu0
      %v541 = vadd.f32 %v293, %v540
      %v542 = vpop.f32.mrf.mxu0
      %543 = vmatprep.mubr.bf16.mxu0 0
      %544 = vmatmul.mubr.bf16.gmra.mxu0 %v368
      %v545 = vpop.f32.mrf.mxu0
      %v546 = vadd.f32 %v293, %v545
      %v547 = vpop.f32.mrf.mxu0
      %v548 = vpop.f32.mrf.mxu0
      %v549 = vadd.f32 %v293, %v548
      %v550 = vpop.f32.mrf.mxu0
      %551 = vmatprep.mubr.bf16.mxu0 0
      %552 = vmatmul.mubr.bf16.gmra.mxu0 %v369
      %v553 = vpop.f32.mrf.mxu0
      %v554 = vadd.f32 %v293, %v553
      %v555 = vpop.f32.mrf.mxu0
      %v556 = vpop.f32.mrf.mxu0
      %v557 = vadd.f32 %v293, %v556
      %v558 = vpop.f32.mrf.mxu0
      %559 = vmatprep.mubr.bf16.mxu0 0
      %560 = vmatmul.mubr.bf16.gmra.mxu0 %v370
      %v561 = vpop.f32.mrf.mxu0
      %v562 = vadd.f32 %v293, %v561
      %v563 = vpop.f32.mrf.mxu0
      %v564 = vpop.f32.mrf.mxu0
      %v565 = vadd.f32 %v293, %v564
      %v566 = vpop.f32.mrf.mxu0
      %567 = vmatprep.mubr.bf16.mxu0 0
      %568 = vmatmul.mubr.bf16.gmra.mxu0 %v371
      %v569 = vpop.f32.mrf.mxu0
      %v570 = vadd.f32 %v293, %v569
      %v571 = vpop.f32.mrf.mxu0
      %v572 = vpop.f32.mrf.mxu0
      %v573 = vadd.f32 %v293, %v572
      %v574 = vpop.f32.mrf.mxu0
      %575 = vmatprep.mubr.bf16.mxu0 0
      %576 = vmatmul.mubr.bf16.gmra.mxu0 %v372
      %v577 = vpop.f32.mrf.mxu0
      %v578 = vadd.f32 %v293, %v577
      %v579 = vpop.f32.mrf.mxu0
      %v580 = vpop.f32.mrf.mxu0
      %v581 = vadd.f32 %v293, %v580
      %v582 = vpop.f32.mrf.mxu0
      %583 = vmatprep.mubr.bf16.mxu0 0
      %584 = vmatmul.mubr.bf16.gmra.mxu0 %v373
      %v585 = vpop.f32.mrf.mxu0
      %v586 = vadd.f32 %v293, %v585
      %v587 = vpop.f32.mrf.mxu0
      %v588 = vpop.f32.mrf.mxu0
      %v589 = vadd.f32 %v293, %v588
      %v590 = vpop.f32.mrf.mxu0
      %591 = vmatprep.mubr.bf16.mxu0 0
      %592 = vmatmul.mubr.bf16.gmra.mxu0 %v374
      %v593 = vpop.f32.mrf.mxu0
      %v594 = vadd.f32 %v293, %v593
      %v595 = vpop.f32.mrf.mxu0
      %v596 = vpop.f32.mrf.mxu0
      %v597 = vadd.f32 %v293, %v596
      %v598 = vpop.f32.mrf.mxu0
      %599 = vdwg.mxu0
      %v600 = vmul.f32 %v474, 0.2
      %v601 = vmul.f32 %v477, 0.2
      %v602 = vmul.f32 %v482, 0.2
      %v603 = vmul.f32 %v485, 0.2
      %v604 = vmul.f32 %v490, 0.2
      %v605 = vmul.f32 %v493, 0.2
      %v606 = vmul.f32 %v498, 0.2
      %v607 = vmul.f32 %v501, 0.2
      %v608 = vmul.f32 %v506, 0.2
      %v609 = vmul.f32 %v509, 0.2
      %v610 = vmul.f32 %v514, 0.2
      %v611 = vmul.f32 %v517, 0.2
      %v612 = vmul.f32 %v522, 0.2
      %v613 = vmul.f32 %v525, 0.2
      %v614 = vmul.f32 %v530, 0.2
      %v615 = vmul.f32 %v533, 0.2
      %v616 = vmul.f32 %v538, 0.2
      %v617 = vmul.f32 %v541, 0.2
      %v618 = vmul.f32 %v546, 0.2
      %v619 = vmul.f32 %v549, 0.2
      %v620 = vmul.f32 %v554, 0.2
      %v621 = vmul.f32 %v557, 0.2
      %v622 = vmul.f32 %v562, 0.2
      %v623 = vmul.f32 %v565, 0.2
      %v624 = vmul.f32 %v570, 0.2
      %v625 = vmul.f32 %v573, 0.2
      %v626 = vmul.f32 %v578, 0.2
      %v627 = vmul.f32 %v581, 0.2
      %v628 = vmul.f32 %v586, 0.2
      %v629 = vmul.f32 %v589, 0.2
      %v630 = vmul.f32 %v594, 0.2
      %v631 = vmul.f32 %v597, 0.2
      %v632 = vmax.f32 %v474, %v600
      %v633 = vmax.f32 %v477, %v601
      %v634 = vmax.f32 %v482, %v602
      %v635 = vmax.f32 %v485, %v603
      %v636 = vmax.f32 %v490, %v604
      %v637 = vmax.f32 %v493, %v605
      %v638 = vmax.f32 %v498, %v606
      %v639 = vmax.f32 %v501, %v607
      %v640 = vmax.f32 %v506, %v608
      %v641 = vmax.f32 %v509, %v609
      %v642 = vmax.f32 %v514, %v610
      %v643 = vmax.f32 %v517, %v611
      %v644 = vmax.f32 %v522, %v612
      %v645 = vmax.f32 %v525, %v613
      %v646 = vmax.f32 %v530, %v614
      %v647 = vmax.f32 %v533, %v615
      %v648 = vmax.f32 %v538, %v616
      %v649 = vmax.f32 %v541, %v617
      %v650 = vmax.f32 %v546, %v618
      %v651 = vmax.f32 %v549, %v619
      %v652 = vmax.f32 %v554, %v620
      %v653 = vmax.f32 %v557, %v621
      %v654 = vmax.f32 %v562, %v622
      %v655 = vmax.f32 %v565, %v623
      %v656 = vmax.f32 %v570, %v624
      %v657 = vmax.f32 %v573, %v625
      %v658 = vmax.f32 %v578, %v626
      %v659 = vmax.f32 %v581, %v627
      %v660 = vmax.f32 %v586, %v628
      %v661 = vmax.f32 %v589, %v629
      %v662 = vmax.f32 %v594, %v630
      %v663 = vmax.f32 %v597, %v631
      %v664 = vpack.c.bf16 %v633, %v632
      %v665 = vpack.c.bf16 %v635, %v634
      %v666 = vpack.c.bf16 %v637, %v636
      %v667 = vpack.c.bf16 %v639, %v638
      %v668 = vpack.c.bf16 %v641, %v640
      %v669 = vpack.c.bf16 %v643, %v642
      %v670 = vpack.c.bf16 %v645, %v644
      %v671 = vpack.c.bf16 %v647, %v646
      %v672 = vpack.c.bf16 %v649, %v648
      %v673 = vpack.c.bf16 %v651, %v650
      %v674 = vpack.c.bf16 %v653, %v652
      %v675 = vpack.c.bf16 %v655, %v654
      %v676 = vpack.c.bf16 %v657, %v656
      %v677 = vpack.c.bf16 %v659, %v658
      %v678 = vpack.c.bf16 %v661, %v660
      %v679 = vpack.c.bf16 %v663, %v662
      %v680 = vld [vmem:[%s3] sm:$0xf]
      %v681 = vld [vmem:[%s3 + $0x4] sm:$0xf]
      %v682 = vld [vmem:[%s3 + $0x8] sm:$0xf]
      %v683 = vld [vmem:[%s3 + $0xc] sm:$0xf]
      %v684 = vld [vmem:[%s3 + $0x10] sm:$0xf]
      %v685 = vld [vmem:[%s3 + $0x14] sm:$0xf]
      %v686 = vld [vmem:[%s3 + $0x18] sm:$0xf]
      %v687 = vld [vmem:[%s3 + $0x1c] sm:$0xf]
      %v688 = vld [vmem:[%s3 + $0x20] sm:$0xf]
      %v689 = vld [vmem:[%s3 + $0x24] sm:$0xf]
      %v690 = vld [vmem:[%s3 + $0x28] sm:$0xf]
      %v691 = vld [vmem:[%s3 + $0x2c] sm:$0xf]
      %v692 = vld [vmem:[%s3 + $0x30] sm:$0xf]
      %v693 = vld [vmem:[%s3 + $0x34] sm:$0xf]
      %v694 = vld [vmem:[%s3 + $0x38] sm:$0xf]
      %v695 = vld [vmem:[%s3 + $0x3c] sm:$0xf]
      %v712 = vunpack.c.l.b16 %v680
      %v713 = vunpack.c.l.b16 %v681
      %v714 = vunpack.c.l.b16 %v682
      %v715 = vunpack.c.l.b16 %v683
      %v716 = vunpack.c.l.b16 %v684
      %v717 = vunpack.c.l.b16 %v685
      %v718 = vunpack.c.l.b16 %v686
      %v719 = vunpack.c.l.b16 %v687
      %v720 = vunpack.c.l.b16 %v688
      %v721 = vunpack.c.l.b16 %v689
      %v722 = vunpack.c.l.b16 %v690
      %v723 = vunpack.c.l.b16 %v691
      %v724 = vunpack.c.l.b16 %v692
      %v725 = vunpack.c.l.b16 %v693
      %v726 = vunpack.c.l.b16 %v694
      %v727 = vunpack.c.l.b16 %v695
      %v728 = vpack.c.b16 %v713, %v712
      %v729 = vpack.c.b16 %v715, %v714
      %v730 = vpack.c.b16 %v717, %v716
      %v731 = vpack.c.b16 %v719, %v718
      %v732 = vpack.c.b16 %v721, %v720
      %v733 = vpack.c.b16 %v723, %v722
      %v734 = vpack.c.b16 %v725, %v724
      %v735 = vpack.c.b16 %v727, %v726
      %744 = vmatprep.subr.bf16.mxu0 0
      %745 = vmatpush1.bf16.msra.mxu0 %v735
      %746 = vmatprep.subr.bf16.mxu0 0
      %747 = vmatpush1.bf16.msra.mxu0 %v734
      %748 = vmatprep.subr.bf16.mxu0 0
      %749 = vmatpush1.bf16.msra.mxu0 %v733
      %750 = vmatprep.subr.bf16.mxu0 0
      %751 = vmatpush1.bf16.msra.mxu0 %v732
      %752 = vmatprep.subr.bf16.mxu0 0
      %753 = vmatpush1.bf16.msra.mxu0 %v731
      %754 = vmatprep.subr.bf16.mxu0 0
      %755 = vmatpush1.bf16.msra.mxu0 %v730
      %756 = vmatprep.subr.bf16.mxu0 0
      %757 = vmatpush1.bf16.msra.mxu0 %v729
      %758 = vmatprep.subr.bf16.mxu0 0
      %759 = vmatpush1.bf16.msra.mxu0 %v728
      %760 = vmatprep.subr.bf16.mxu0 0
      %761 = vmatpush2.bf16.msra.mxu0 0
      %762 = vmatprep.subr.bf16.mxu0 0
      %763 = vmatpush2.bf16.msra.mxu0 0
      %764 = vmatprep.subr.bf16.mxu0 0
      %765 = vmatpush2.bf16.msra.mxu0 0
      %766 = vmatprep.subr.bf16.mxu0 0
      %767 = vmatpush2.bf16.msra.mxu0 0
      %768 = vmatprep.subr.bf16.mxu0 0
      %769 = vmatpush2.bf16.msra.mxu0 0
      %770 = vmatprep.subr.bf16.mxu0 0
      %771 = vmatpush2.bf16.msra.mxu0 0
      %772 = vmatprep.subr.bf16.mxu0 0
      %773 = vmatpush2.bf16.msra.mxu0 0
      %774 = vmatprep.subr.bf16.mxu0 0
      %775 = vmatpush2.bf16.msra.mxu0 0
      %776 = vmatprep.mubr.bf16.mxu0 0
      %777 = vmatmul.mubr.bf16.gmra.mxu0 %v664
      %v778 = vpop.f32.mrf.mxu0
      %v779 = vadd.f32 0.0, %v778
      %v780 = vpop.f32.mrf.mxu0
      %v781 = vpop.f32.mrf.mxu0
      %v782 = vadd.f32 0.0, %v781
      %v783 = vpop.f32.mrf.mxu0
      %784 = vmatprep.mubr.bf16.mxu0 0
      %785 = vmatmul.mubr.bf16.gmra.mxu0 %v665
      %v786 = vpop.f32.mrf.mxu0
      %v787 = vadd.f32 0.0, %v786
      %v788 = vpop.f32.mrf.mxu0
      %v789 = vpop.f32.mrf.mxu0
      %v790 = vadd.f32 0.0, %v789
      %v791 = vpop.f32.mrf.mxu0
      %792 = vmatprep.mubr.bf16.mxu0 0
      %793 = vmatmul.mubr.bf16.gmra.mxu0 %v666
      %v794 = vpop.f32.mrf.mxu0
      %v795 = vadd.f32 0.0, %v794
      %v796 = vpop.f32.mrf.mxu0
      %v797 = vpop.f32.mrf.mxu0
      %v798 = vadd.f32 0.0, %v797
      %v799 = vpop.f32.mrf.mxu0
      %800 = vmatprep.mubr.bf16.mxu0 0
      %801 = vmatmul.mubr.bf16.gmra.mxu0 %v667
      %v802 = vpop.f32.mrf.mxu0
      %v803 = vadd.f32 0.0, %v802
      %v804 = vpop.f32.mrf.mxu0
      %v805 = vpop.f32.mrf.mxu0
      %v806 = vadd.f32 0.0, %v805
      %v807 = vpop.f32.mrf.mxu0
      %808 = vmatprep.mubr.bf16.mxu0 0
      %809 = vmatmul.mubr.bf16.gmra.mxu0 %v668
      %v810 = vpop.f32.mrf.mxu0
      %v811 = vadd.f32 0.0, %v810
      %v812 = vpop.f32.mrf.mxu0
      %v813 = vpop.f32.mrf.mxu0
      %v814 = vadd.f32 0.0, %v813
      %v815 = vpop.f32.mrf.mxu0
      %816 = vmatprep.mubr.bf16.mxu0 0
      %817 = vmatmul.mubr.bf16.gmra.mxu0 %v669
      %v818 = vpop.f32.mrf.mxu0
      %v819 = vadd.f32 0.0, %v818
      %v820 = vpop.f32.mrf.mxu0
      %v821 = vpop.f32.mrf.mxu0
      %v822 = vadd.f32 0.0, %v821
      %v823 = vpop.f32.mrf.mxu0
      %824 = vmatprep.mubr.bf16.mxu0 0
      %825 = vmatmul.mubr.bf16.gmra.mxu0 %v670
      %v826 = vpop.f32.mrf.mxu0
      %v827 = vadd.f32 0.0, %v826
      %v828 = vpop.f32.mrf.mxu0
      %v829 = vpop.f32.mrf.mxu0
      %v830 = vadd.f32 0.0, %v829
      %v831 = vpop.f32.mrf.mxu0
      %832 = vmatprep.mubr.bf16.mxu0 0
      %833 = vmatmul.mubr.bf16.gmra.mxu0 %v671
      %v834 = vpop.f32.mrf.mxu0
      %v835 = vadd.f32 0.0, %v834
      %v836 = vpop.f32.mrf.mxu0
      %v837 = vpop.f32.mrf.mxu0
      %v838 = vadd.f32 0.0, %v837
      %v839 = vpop.f32.mrf.mxu0
      %840 = vmatprep.mubr.bf16.mxu0 0
      %841 = vmatmul.mubr.bf16.gmra.mxu0 %v672
      %v842 = vpop.f32.mrf.mxu0
      %v843 = vadd.f32 0.0, %v842
      %v844 = vpop.f32.mrf.mxu0
      %v845 = vpop.f32.mrf.mxu0
      %v846 = vadd.f32 0.0, %v845
      %v847 = vpop.f32.mrf.mxu0
      %848 = vmatprep.mubr.bf16.mxu0 0
      %849 = vmatmul.mubr.bf16.gmra.mxu0 %v673
      %v850 = vpop.f32.mrf.mxu0
      %v851 = vadd.f32 0.0, %v850
      %v852 = vpop.f32.mrf.mxu0
      %v853 = vpop.f32.mrf.mxu0
      %v854 = vadd.f32 0.0, %v853
      %v855 = vpop.f32.mrf.mxu0
      %856 = vmatprep.mubr.bf16.mxu0 0
      %857 = vmatmul.mubr.bf16.gmra.mxu0 %v674
      %v858 = vpop.f32.mrf.mxu0
      %v859 = vadd.f32 0.0, %v858
      %v860 = vpop.f32.mrf.mxu0
      %v861 = vpop.f32.mrf.mxu0
      %v862 = vadd.f32 0.0, %v861
      %v863 = vpop.f32.mrf.mxu0
      %864 = vmatprep.mubr.bf16.mxu0 0
      %865 = vmatmul.mubr.bf16.gmra.mxu0 %v675
      %v866 = vpop.f32.mrf.mxu0
      %v867 = vadd.f32 0.0, %v866
      %v868 = vpop.f32.mrf.mxu0
      %v869 = vpop.f32.mrf.mxu0
      %v870 = vadd.f32 0.0, %v869
      %v871 = vpop.f32.mrf.mxu0
      %872 = vmatprep.mubr.bf16.mxu0 0
      %873 = vmatmul.mubr.bf16.gmra.mxu0 %v676
      %v874 = vpop.f32.mrf.mxu0
      %v875 = vadd.f32 0.0, %v874
      %v876 = vpop.f32.mrf.mxu0
      %v877 = vpop.f32.mrf.mxu0
      %v878 = vadd.f32 0.0, %v877
      %v879 = vpop.f32.mrf.mxu0
      %880 = vmatprep.mubr.bf16.mxu0 0
      %881 = vmatmul.mubr.bf16.gmra.mxu0 %v677
      %v882 = vpop.f32.mrf.mxu0
      %v883 = vadd.f32 0.0, %v882
      %v884 = vpop.f32.mrf.mxu0
      %v885 = vpop.f32.mrf.mxu0
      %v886 = vadd.f32 0.0, %v885
      %v887 = vpop.f32.mrf.mxu0
      %888 = vmatprep.mubr.bf16.mxu0 0
      %889 = vmatmul.mubr.bf16.gmra.mxu0 %v678
      %v890 = vpop.f32.mrf.mxu0
      %v891 = vadd.f32 0.0, %v890
      %v892 = vpop.f32.mrf.mxu0
      %v893 = vpop.f32.mrf.mxu0
      %v894 = vadd.f32 0.0, %v893
      %v895 = vpop.f32.mrf.mxu0
      %896 = vmatprep.mubr.bf16.mxu0 0
      %897 = vmatmul.mubr.bf16.gmra.mxu0 %v679
      %v898 = vpop.f32.mrf.mxu0
      %v899 = vadd.f32 0.0, %v898
      %v900 = vpop.f32.mrf.mxu0
      %v901 = vpop.f32.mrf.mxu0
      %v902 = vadd.f32 0.0, %v901
      %v903 = vpop.f32.mrf.mxu0
      %904 = vdwg.mxu0
      %v905 = vpack.c.bf16 %v782, %v779
      %v906 = vpack.c.bf16 %v790, %v787
      %v907 = vpack.c.bf16 %v798, %v795
      %v908 = vpack.c.bf16 %v806, %v803
      %v909 = vpack.c.bf16 %v814, %v811
      %v910 = vpack.c.bf16 %v822, %v819
      %v911 = vpack.c.bf16 %v830, %v827
      %v912 = vpack.c.bf16 %v838, %v835
      %v913 = vpack.c.bf16 %v846, %v843
      %v914 = vpack.c.bf16 %v854, %v851
      %v915 = vpack.c.bf16 %v862, %v859
      %v916 = vpack.c.bf16 %v870, %v867
      %v917 = vpack.c.bf16 %v878, %v875
      %v918 = vpack.c.bf16 %v886, %v883
      %v919 = vpack.c.bf16 %v894, %v891
      %v920 = vpack.c.bf16 %v902, %v899
      %v937 = vunpack.c.l.b16 %v905
      %v938 = vunpack.c.h.b16 %v905
      %v939 = vunpack.c.l.b16 %v906
      %v940 = vunpack.c.h.b16 %v906
      %v941 = vunpack.c.l.b16 %v907
      %v942 = vunpack.c.h.b16 %v907
      %v943 = vunpack.c.l.b16 %v908
      %v944 = vunpack.c.h.b16 %v908
      %v945 = vunpack.c.l.b16 %v909
      %v946 = vunpack.c.h.b16 %v909
      %v947 = vunpack.c.l.b16 %v910
      %v948 = vunpack.c.h.b16 %v910
      %v949 = vunpack.c.l.b16 %v911
      %v950 = vunpack.c.h.b16 %v911
      %v951 = vunpack.c.l.b16 %v912
      %v952 = vunpack.c.h.b16 %v912
      %v953 = vunpack.c.l.b16 %v913
      %v954 = vunpack.c.h.b16 %v913
      %v955 = vunpack.c.l.b16 %v914
      %v956 = vunpack.c.h.b16 %v914
      %v957 = vunpack.c.l.b16 %v915
      %v958 = vunpack.c.h.b16 %v915
      %v959 = vunpack.c.l.b16 %v916
      %v960 = vunpack.c.h.b16 %v916
      %v961 = vunpack.c.l.b16 %v917
      %v962 = vunpack.c.h.b16 %v917
      %v963 = vunpack.c.l.b16 %v918
      %v964 = vunpack.c.h.b16 %v918
      %v965 = vunpack.c.l.b16 %v919
      %v966 = vunpack.c.h.b16 %v919
      %v967 = vunpack.c.l.b16 %v920
      %v968 = vunpack.c.h.b16 %v920
      %v969 = vpack.c.b16 %v937, %v937
      %v970 = vpack.c.b16 %v938, %v938
      %v971 = vpack.c.b16 %v939, %v939
      %v972 = vpack.c.b16 %v940, %v940
      %v973 = vpack.c.b16 %v941, %v941
      %v974 = vpack.c.b16 %v942, %v942
      %v975 = vpack.c.b16 %v943, %v943
      %v976 = vpack.c.b16 %v944, %v944
      %v977 = vpack.c.b16 %v945, %v945
      %v978 = vpack.c.b16 %v946, %v946
      %v979 = vpack.c.b16 %v947, %v947
      %v980 = vpack.c.b16 %v948, %v948
      %v981 = vpack.c.b16 %v949, %v949
      %v982 = vpack.c.b16 %v950, %v950
      %v983 = vpack.c.b16 %v951, %v951
      %v984 = vpack.c.b16 %v952, %v952
      %v985 = vpack.c.b16 %v953, %v953
      %v986 = vpack.c.b16 %v954, %v954
      %v987 = vpack.c.b16 %v955, %v955
      %v988 = vpack.c.b16 %v956, %v956
      %v989 = vpack.c.b16 %v957, %v957
      %v990 = vpack.c.b16 %v958, %v958
      %v991 = vpack.c.b16 %v959, %v959
      %v992 = vpack.c.b16 %v960, %v960
      %v993 = vpack.c.b16 %v961, %v961
      %v994 = vpack.c.b16 %v962, %v962
      %v995 = vpack.c.b16 %v963, %v963
      %v996 = vpack.c.b16 %v964, %v964
      %v997 = vpack.c.b16 %v965, %v965
      %v998 = vpack.c.b16 %v966, %v966
      %v999 = vpack.c.b16 %v967, %v967
      %v1000 = vpack.c.b16 %v968, %v968
      %1033 = vst [vmem:[%s233] sm:$0xf] %v969
      %1034 = vst [vmem:[%s233 + $0x4] sm:$0xf] %v970
      %1035 = vst [vmem:[%s233 + $0x8] sm:$0xf] %v971
      %1036 = vst [vmem:[%s233 + $0xc] sm:$0xf] %v972
      %1037 = vst [vmem:[%s233 + $0x10] sm:$0xf] %v973
      %1038 = vst [vmem:[%s233 + $0x14] sm:$0xf] %v974
      %1039 = vst [vmem:[%s233 + $0x18] sm:$0xf] %v975
      %1040 = vst [vmem:[%s233 + $0x1c] sm:$0xf] %v976
      %1041 = vst [vmem:[%s233 + $0x20] sm:$0xf] %v977
      %1042 = vst [vmem:[%s233 + $0x24] sm:$0xf] %v978
      %1043 = vst [vmem:[%s233 + $0x28] sm:$0xf] %v979
      %1044 = vst [vmem:[%s233 + $0x2c] sm:$0xf] %v980
      %1045 = vst [vmem:[%s233 + $0x30] sm:$0xf] %v981
      %1046 = vst [vmem:[%s233 + $0x34] sm:$0xf] %v982
      %1047 = vst [vmem:[%s233 + $0x38] sm:$0xf] %v983
      %1048 = vst [vmem:[%s233 + $0x3c] sm:$0xf] %v984
      %1049 = vst [vmem:[%s233 + $0x40] sm:$0xf] %v985
      %1050 = vst [vmem:[%s233 + $0x44] sm:$0xf] %v986
      %1051 = vst [vmem:[%s233 + $0x48] sm:$0xf] %v987
      %1052 = vst [vmem:[%s233 + $0x4c] sm:$0xf] %v988
      %1053 = vst [vmem:[%s233 + $0x50] sm:$0xf] %v989
      %1054 = vst [vmem:[%s233 + $0x54] sm:$0xf] %v990
      %1055 = vst [vmem:[%s233 + $0x58] sm:$0xf] %v991
      %1056 = vst [vmem:[%s233 + $0x5c] sm:$0xf] %v992
      %1057 = vst [vmem:[%s233 + $0x60] sm:$0xf] %v993
      %1058 = vst [vmem:[%s233 + $0x64] sm:$0xf] %v994
      %1059 = vst [vmem:[%s233 + $0x68] sm:$0xf] %v995
      %1060 = vst [vmem:[%s233 + $0x6c] sm:$0xf] %v996
      %1061 = vst [vmem:[%s233 + $0x70] sm:$0xf] %v997
      %1062 = vst [vmem:[%s233 + $0x74] sm:$0xf] %v998
      %1063 = vst [vmem:[%s233 + $0x78] sm:$0xf] %v999
      %1064 = vst [vmem:[%s233 + $0x7c] sm:$0xf] %v1000
      %s1065 = smul.u32 %s17, 256
      %v1066 = vlaneseq
      %v1067 = vshrl.u32 %v1066, 7
      %v1068 = vadd.s32 %v1067, 8
      %v1069 = vadd.s32 %v1067, 16
      %v1070 = vadd.s32 %v1067, 24
      %v1071 = vadd.s32 %v1067, 32
      %v1072 = vadd.s32 %v1067, 40
      %v1073 = vadd.s32 %v1067, 48
      %v1074 = vadd.s32 %v1067, 56
      %v1075 = vadd.s32 %v1067, 64
      %v1076 = vadd.s32 %v1067, 72
      %v1077 = vadd.s32 %v1067, 80
      %v1078 = vadd.s32 %v1067, 88
      %v1079 = vadd.s32 %v1067, 96
      %v1080 = vadd.s32 %v1067, 104
      %v1081 = vadd.s32 %v1067, 112
      %v1082 = vadd.s32 %v1067, 120
      %v1083 = vadd.s32 %v1067, 128
      %v1084 = vadd.s32 %v1067, 136
      %v1085 = vadd.s32 %v1067, 144
      %v1086 = vadd.s32 %v1067, 152
      %v1087 = vadd.s32 %v1067, 160
      %v1088 = vadd.s32 %v1067, 168
      %v1089 = vadd.s32 %v1067, 176
      %v1090 = vadd.s32 %v1067, 184
      %v1091 = vadd.s32 %v1067, 192
      %v1092 = vadd.s32 %v1067, 200
      %v1093 = vadd.s32 %v1067, 208
      %v1094 = vadd.s32 %v1067, 216
      %v1095 = vadd.s32 %v1067, 224
      %v1096 = vadd.s32 %v1067, 232
      %v1097 = vadd.s32 %v1067, 240
      %v1098 = vadd.s32 %v1067, 248
      %v1099 = vstv %s1065
      %v1100 = vadd.s32 %v1099, %v1067
      %v1101 = vadd.s32 %v1099, %v1068
      %v1102 = vadd.s32 %v1099, %v1069
      %v1103 = vadd.s32 %v1099, %v1070
      %v1104 = vadd.s32 %v1099, %v1071
      %v1105 = vadd.s32 %v1099, %v1072
      %v1106 = vadd.s32 %v1099, %v1073
      %v1107 = vadd.s32 %v1099, %v1074
      %v1108 = vadd.s32 %v1099, %v1075
      %v1109 = vadd.s32 %v1099, %v1076
      %v1110 = vadd.s32 %v1099, %v1077
      %v1111 = vadd.s32 %v1099, %v1078
      %v1112 = vadd.s32 %v1099, %v1079
      %v1113 = vadd.s32 %v1099, %v1080
      %v1114 = vadd.s32 %v1099, %v1081
      %v1115 = vadd.s32 %v1099, %v1082
      %v1116 = vadd.s32 %v1099, %v1083
      %v1117 = vadd.s32 %v1099, %v1084
      %v1118 = vadd.s32 %v1099, %v1085
      %v1119 = vadd.s32 %v1099, %v1086
      %v1120 = vadd.s32 %v1099, %v1087
      %v1121 = vadd.s32 %v1099, %v1088
      %v1122 = vadd.s32 %v1099, %v1089
      %v1123 = vadd.s32 %v1099, %v1090
      %v1124 = vadd.s32 %v1099, %v1091
      %v1125 = vadd.s32 %v1099, %v1092
      %v1126 = vadd.s32 %v1099, %v1093
      %v1127 = vadd.s32 %v1099, %v1094
      %v1128 = vadd.s32 %v1099, %v1095
      %v1129 = vadd.s32 %v1099, %v1096
      %v1130 = vadd.s32 %v1099, %v1097
      %v1131 = vadd.s32 %v1099, %v1098
      %vm1132 = vcmp.lt.s32.totalorder %v1100, 512
      %vm1133 = vcmp.lt.s32.totalorder %v1101, 512
      %vm1134 = vcmp.lt.s32.totalorder %v1102, 512
      %vm1135 = vcmp.lt.s32.totalorder %v1103, 512
      %vm1136 = vcmp.lt.s32.totalorder %v1104, 512
      %vm1137 = vcmp.lt.s32.totalorder %v1105, 512
      %vm1138 = vcmp.lt.s32.totalorder %v1106, 512
      %vm1139 = vcmp.lt.s32.totalorder %v1107, 512
      %vm1140 = vcmp.lt.s32.totalorder %v1108, 512
      %vm1141 = vcmp.lt.s32.totalorder %v1109, 512
      %vm1142 = vcmp.lt.s32.totalorder %v1110, 512
      %vm1143 = vcmp.lt.s32.totalorder %v1111, 512
      %vm1144 = vcmp.lt.s32.totalorder %v1112, 512
      %vm1145 = vcmp.lt.s32.totalorder %v1113, 512
      %vm1146 = vcmp.lt.s32.totalorder %v1114, 512
      %vm1147 = vcmp.lt.s32.totalorder %v1115, 512
      %vm1148 = vcmp.lt.s32.totalorder %v1116, 512
      %vm1149 = vcmp.lt.s32.totalorder %v1117, 512
      %vm1150 = vcmp.lt.s32.totalorder %v1118, 512
      %vm1151 = vcmp.lt.s32.totalorder %v1119, 512
      %vm1152 = vcmp.lt.s32.totalorder %v1120, 512
      %vm1153 = vcmp.lt.s32.totalorder %v1121, 512
      %vm1154 = vcmp.lt.s32.totalorder %v1122, 512
      %vm1155 = vcmp.lt.s32.totalorder %v1123, 512
      %vm1156 = vcmp.lt.s32.totalorder %v1124, 512
      %vm1157 = vcmp.lt.s32.totalorder %v1125, 512
      %vm1158 = vcmp.lt.s32.totalorder %v1126, 512
      %vm1159 = vcmp.lt.s32.totalorder %v1127, 512
      %vm1160 = vcmp.lt.s32.totalorder %v1128, 512
      %vm1161 = vcmp.lt.s32.totalorder %v1129, 512
      %vm1162 = vcmp.lt.s32.totalorder %v1130, 512
      %vm1163 = vcmp.lt.s32.totalorder %v1131, 512
      %v1164 = vsel %vm1132, 1, 0
      %v1165 = vsel %vm1133, 1, 0
      %v1166 = vsel %vm1134, 1, 0
      %v1167 = vsel %vm1135, 1, 0
      %v1168 = vsel %vm1136, 1, 0
      %v1169 = vsel %vm1137, 1, 0
      %v1170 = vsel %vm1138, 1, 0
      %v1171 = vsel %vm1139, 1, 0
      %v1172 = vsel %vm1140, 1, 0
      %v1173 = vsel %vm1141, 1, 0
      %v1174 = vsel %vm1142, 1, 0
      %v1175 = vsel %vm1143, 1, 0
      %v1176 = vsel %vm1144, 1, 0
      %v1177 = vsel %vm1145, 1, 0
      %v1178 = vsel %vm1146, 1, 0
      %v1179 = vsel %vm1147, 1, 0
      %v1180 = vsel %vm1148, 1, 0
      %v1181 = vsel %vm1149, 1, 0
      %v1182 = vsel %vm1150, 1, 0
      %v1183 = vsel %vm1151, 1, 0
      %v1184 = vsel %vm1152, 1, 0
      %v1185 = vsel %vm1153, 1, 0
      %v1186 = vsel %vm1154, 1, 0
      %v1187 = vsel %vm1155, 1, 0
      %v1188 = vsel %vm1156, 1, 0
      %v1189 = vsel %vm1157, 1, 0
      %v1190 = vsel %vm1158, 1, 0
      %v1191 = vsel %vm1159, 1, 0
      %v1192 = vsel %vm1160, 1, 0
      %v1193 = vsel %vm1161, 1, 0
      %v1194 = vsel %vm1162, 1, 0
      %v1195 = vsel %vm1163, 1, 0
      %vm1196 = vcmp.eq.s32.totalorder %v1164, 1
      %vm1197 = vcmp.eq.s32.totalorder %v1165, 1
      %vm1198 = vcmp.eq.s32.totalorder %v1166, 1
      %vm1199 = vcmp.eq.s32.totalorder %v1167, 1
      %vm1200 = vcmp.eq.s32.totalorder %v1168, 1
      %vm1201 = vcmp.eq.s32.totalorder %v1169, 1
      %vm1202 = vcmp.eq.s32.totalorder %v1170, 1
      %vm1203 = vcmp.eq.s32.totalorder %v1171, 1
      %vm1204 = vcmp.eq.s32.totalorder %v1172, 1
      %vm1205 = vcmp.eq.s32.totalorder %v1173, 1
      %vm1206 = vcmp.eq.s32.totalorder %v1174, 1
      %vm1207 = vcmp.eq.s32.totalorder %v1175, 1
      %vm1208 = vcmp.eq.s32.totalorder %v1176, 1
      %vm1209 = vcmp.eq.s32.totalorder %v1177, 1
      %vm1210 = vcmp.eq.s32.totalorder %v1178, 1
      %vm1211 = vcmp.eq.s32.totalorder %v1179, 1
      %vm1212 = vcmp.eq.s32.totalorder %v1180, 1
      %vm1213 = vcmp.eq.s32.totalorder %v1181, 1
      %vm1214 = vcmp.eq.s32.totalorder %v1182, 1
      %vm1215 = vcmp.eq.s32.totalorder %v1183, 1
      %vm1216 = vcmp.eq.s32.totalorder %v1184, 1
      %vm1217 = vcmp.eq.s32.totalorder %v1185, 1
      %vm1218 = vcmp.eq.s32.totalorder %v1186, 1
      %vm1219 = vcmp.eq.s32.totalorder %v1187, 1
      %vm1220 = vcmp.eq.s32.totalorder %v1188, 1
      %vm1221 = vcmp.eq.s32.totalorder %v1189, 1
      %vm1222 = vcmp.eq.s32.totalorder %v1190, 1
      %vm1223 = vcmp.eq.s32.totalorder %v1191, 1
      %vm1224 = vcmp.eq.s32.totalorder %v1192, 1
      %vm1225 = vcmp.eq.s32.totalorder %v1193, 1
      %vm1226 = vcmp.eq.s32.totalorder %v1194, 1
      %vm1227 = vcmp.eq.s32.totalorder %v1195, 1
      %v1228 = vsel %vm1196, %v779, 0.0
      %v1229 = vsel %vm1197, %v782, 0.0
      %v1230 = vsel %vm1198, %v787, 0.0
      %v1231 = vsel %vm1199, %v790, 0.0
      %v1232 = vsel %vm1200, %v795, 0.0
      %v1233 = vsel %vm1201, %v798, 0.0
      %v1234 = vsel %vm1202, %v803, 0.0
      %v1235 = vsel %vm1203, %v806, 0.0
      %v1236 = vsel %vm1204, %v811, 0.0
      %v1237 = vsel %vm1205, %v814, 0.0
      %v1238 = vsel %vm1206, %v819, 0.0
      %v1239 = vsel %vm1207, %v822, 0.0
      %v1240 = vsel %vm1208, %v827, 0.0
      %v1241 = vsel %vm1209, %v830, 0.0
      %v1242 = vsel %vm1210, %v835, 0.0
      %v1243 = vsel %vm1211, %v838, 0.0
      %v1244 = vsel %vm1212, %v843, 0.0
      %v1245 = vsel %vm1213, %v846, 0.0
      %v1246 = vsel %vm1214, %v851, 0.0
      %v1247 = vsel %vm1215, %v854, 0.0
      %v1248 = vsel %vm1216, %v859, 0.0
      %v1249 = vsel %vm1217, %v862, 0.0
      %v1250 = vsel %vm1218, %v867, 0.0
      %v1251 = vsel %vm1219, %v870, 0.0
      %v1252 = vsel %vm1220, %v875, 0.0
      %v1253 = vsel %vm1221, %v878, 0.0
      %v1254 = vsel %vm1222, %v883, 0.0
      %v1255 = vsel %vm1223, %v886, 0.0
      %v1256 = vsel %vm1224, %v891, 0.0
      %v1257 = vsel %vm1225, %v894, 0.0
      %v1258 = vsel %vm1226, %v899, 0.0
      %v1259 = vsel %vm1227, %v902, 0.0
      %v1260 = vadd.f32 %v1228, %v1229
      %v1261 = vadd.f32 %v1260, %v1230
      %v1262 = vadd.f32 %v1261, %v1231
      %v1263 = vadd.f32 %v1262, %v1232
      %v1264 = vadd.f32 %v1263, %v1233
      %v1265 = vadd.f32 %v1264, %v1234
      %v1266 = vadd.f32 %v1265, %v1235
      %v1267 = vadd.f32 %v1266, %v1236
      %v1268 = vadd.f32 %v1267, %v1237
      %v1269 = vadd.f32 %v1268, %v1238
      %v1270 = vadd.f32 %v1269, %v1239
      %v1271 = vadd.f32 %v1270, %v1240
      %v1272 = vadd.f32 %v1271, %v1241
      %v1273 = vadd.f32 %v1272, %v1242
      %v1274 = vadd.f32 %v1273, %v1243
      %v1275 = vadd.f32 %v1274, %v1244
      %v1276 = vadd.f32 %v1275, %v1245
      %v1277 = vadd.f32 %v1276, %v1246
      %v1278 = vadd.f32 %v1277, %v1247
      %v1279 = vadd.f32 %v1278, %v1248
      %v1280 = vadd.f32 %v1279, %v1249
      %v1281 = vadd.f32 %v1280, %v1250
      %v1282 = vadd.f32 %v1281, %v1251
      %v1283 = vadd.f32 %v1282, %v1252
      %v1284 = vadd.f32 %v1283, %v1253
      %v1285 = vadd.f32 %v1284, %v1254
      %v1286 = vadd.f32 %v1285, %v1255
      %v1287 = vadd.f32 %v1286, %v1256
      %v1288 = vadd.f32 %v1287, %v1257
      %v1289 = vadd.f32 %v1288, %v1258
      %v1290 = vadd.f32 %v1289, %v1259
      %v1291 = vrot.slane %v1290, 4
      %v1292 = vadd.f32 %v1290, %v1291
      %v1293 = vrot.slane %v1292, 2
      %v1294 = vadd.f32 %v1292, %v1293
      %v1295 = vrot.slane %v1294, 1
      %v1296 = vadd.f32 %v1294, %v1295
      %v1297 = vmul.f32 %v1228, %v1228
      %v1298 = vmul.f32 %v1229, %v1229
      %v1299 = vmul.f32 %v1230, %v1230
      %v1300 = vmul.f32 %v1231, %v1231
      %v1301 = vmul.f32 %v1232, %v1232
      %v1302 = vmul.f32 %v1233, %v1233
      %v1303 = vmul.f32 %v1234, %v1234
      %v1304 = vmul.f32 %v1235, %v1235
      %v1305 = vmul.f32 %v1236, %v1236
      %v1306 = vmul.f32 %v1237, %v1237
      %v1307 = vmul.f32 %v1238, %v1238
      %v1308 = vmul.f32 %v1239, %v1239
      %v1309 = vmul.f32 %v1240, %v1240
      %v1310 = vmul.f32 %v1241, %v1241
      %v1311 = vmul.f32 %v1242, %v1242
      %v1312 = vmul.f32 %v1243, %v1243
      %v1313 = vmul.f32 %v1244, %v1244
      %v1314 = vmul.f32 %v1245, %v1245
      %v1315 = vmul.f32 %v1246, %v1246
      %v1316 = vmul.f32 %v1247, %v1247
      %v1317 = vmul.f32 %v1248, %v1248
      %v1318 = vmul.f32 %v1249, %v1249
      %v1319 = vmul.f32 %v1250, %v1250
      %v1320 = vmul.f32 %v1251, %v1251
      %v1321 = vmul.f32 %v1252, %v1252
      %v1322 = vmul.f32 %v1253, %v1253
      %v1323 = vmul.f32 %v1254, %v1254
      %v1324 = vmul.f32 %v1255, %v1255
      %v1325 = vmul.f32 %v1256, %v1256
      %v1326 = vmul.f32 %v1257, %v1257
      %v1327 = vmul.f32 %v1258, %v1258
      %v1328 = vmul.f32 %v1259, %v1259
      %v1329 = vadd.f32 %v1297, %v1298
      %v1330 = vadd.f32 %v1329, %v1299
      %v1331 = vadd.f32 %v1330, %v1300
      %v1332 = vadd.f32 %v1331, %v1301
      %v1333 = vadd.f32 %v1332, %v1302
      %v1334 = vadd.f32 %v1333, %v1303
      %v1335 = vadd.f32 %v1334, %v1304
      %v1336 = vadd.f32 %v1335, %v1305
      %v1337 = vadd.f32 %v1336, %v1306
      %v1338 = vadd.f32 %v1337, %v1307
      %v1339 = vadd.f32 %v1338, %v1308
      %v1340 = vadd.f32 %v1339, %v1309
      %v1341 = vadd.f32 %v1340, %v1310
      %v1342 = vadd.f32 %v1341, %v1311
      %v1343 = vadd.f32 %v1342, %v1312
      %v1344 = vadd.f32 %v1343, %v1313
      %v1345 = vadd.f32 %v1344, %v1314
      %v1346 = vadd.f32 %v1345, %v1315
      %v1347 = vadd.f32 %v1346, %v1316
      %v1348 = vadd.f32 %v1347, %v1317
      %v1349 = vadd.f32 %v1348, %v1318
      %v1350 = vadd.f32 %v1349, %v1319
      %v1351 = vadd.f32 %v1350, %v1320
      %v1352 = vadd.f32 %v1351, %v1321
      %v1353 = vadd.f32 %v1352, %v1322
      %v1354 = vadd.f32 %v1353, %v1323
      %v1355 = vadd.f32 %v1354, %v1324
      %v1356 = vadd.f32 %v1355, %v1325
      %v1357 = vadd.f32 %v1356, %v1326
      %v1358 = vadd.f32 %v1357, %v1327
      %v1359 = vadd.f32 %v1358, %v1328
      %v1360 = vrot.slane %v1359, 4
      %v1361 = vadd.f32 %v1359, %v1360
      %v1362 = vrot.slane %v1361, 2
      %v1363 = vadd.f32 %v1361, %v1362
      %v1364 = vrot.slane %v1363, 1
      %v1365 = vadd.f32 %v1363, %v1364
      %vm1366 = vcmp.eq.s32.totalorder %v1067, 0
      %vm1367 = vcmp.eq.s32.totalorder %v1067, 1
      %v1368 = vsel %vm1367, %v1365, 0.0
      %v1369 = vsel %vm1366, %v1296, %v1368
      %1370 = vst [vmem:[%s238] sm:$0xff] %v1369
      %s1371 = smul.u32 32, %s17
      %p1372 = scmp.lt.s32.totalorder %s1371, 63
      %s1373 = scalar_select %p1372, %s1371, 63
      %s1374 = smul.addr %s1373, 4
      %s1375 = scalar_lea.vmem %s4, %s1374
      %p1376 = scmp.lt.s32.totalorder %s17, 1
      %s1377 = scalar_select %p1376, %s17, 1
      %s1378 = smul.addr %s1377, 8
      %s1379 = scalar_lea.vmem %s5, %s1378
      // Predicated region
      $region37: #{pixel_discriminator_forward.2} parent=35 // pred_check
        %p1380 = pneg %p124
      $region38: #{pixel_discriminator_forward.2} parent=35 // pred_check_branch
        %1382 = sbr.rel (%p1380) target = $region40
      $region39: #{pixel_discriminator_forward.2} parent=35 // pred_region
        %s1383 = smul.u32 32, %s17
      $region40: #{pixel_discriminator_forward.2} parent=35 // pred_fallthru
        _
      // Predicated region
      $region41: #{pixel_discriminator_forward.2} parent=35 // pred_check
        %p1384 = pneg %p150
      $region42: #{pixel_discriminator_forward.2} parent=35 // pred_check_branch
        %1386 = sbr.rel (%p1384) target = $region44
      $region43: #{pixel_discriminator_forward.2} parent=35 // pred_region
        _
      $region44: #{pixel_discriminator_forward.2} parent=35 // pred_fallthru
        _
    $region36: #{pixel_discriminator_forward.2} parent=5 // pred_fallthru
      _
    %p1387 = scmp.le.s32.totalorder 2, %s12
    // Predicated region
    $region45: #{pixel_discriminator_forward.2} parent=5 // pred_check
      %p1388 = pneg %p1387
    $region46: #{pixel_discriminator_forward.2} parent=5 // pred_check_branch
      %1390 = sbr.rel (%p1388) target = $region48
    $region47: #{pixel_discriminator_forward.2} parent=5 // pred_region
      %s1391 = ssub.s32 %s12, 2
      // Predicated region
      $region49: #{pixel_discriminator_forward.2} parent=47 // pred_check
        %p1392 = pneg %p130
      $region50: #{pixel_discriminator_forward.2} parent=47 // pred_check_branch
        %1394 = sbr.rel (%p1392) target = $region52
      $region51: #{pixel_discriminator_forward.2} parent=47 // pred_region
        %s1395 = smul.u32 32, %s18
        %p1396 = scmp.lt.s32.totalorder %s1395, 63
        %s1397 = scalar_select %p1396, %s1395, 63
        %s1398 = smul.addr %s1397, 4
        %s1399 = scalar_lea.vmem %s4, %s1398
      $region52: #{pixel_discriminator_forward.2} parent=47 // pred_fallthru
        _
      // Predicated region
      $region53: #{pixel_discriminator_forward.2} parent=47 // pred_check
        %p1400 = pneg %p156
      $region54: #{pixel_discriminator_forward.2} parent=47 // pred_check_branch
        %1402 = sbr.rel (%p1400) target = $region56
      $region55: #{pixel_discriminator_forward.2} parent=47 // pred_region
        %p1403 = scmp.lt.s32.totalorder %s18, 1
        %s1404 = scalar_select %p1403, %s18, 1
        %s1405 = smul.addr %s1404, 8
        %s1406 = scalar_lea.vmem %s5, %s1405
      $region56: #{pixel_discriminator_forward.2} parent=47 // pred_fallthru
        _
    $region48: #{pixel_discriminator_forward.2} parent=5 // pred_fallthru
      _
  $region6: #{pixel_discriminator_forward.2} parent=0 // loop_footer
    %s16 = sadd.s32 1, %s12
  $region7: #{pixel_discriminator_forward.2} parent=0 // loop_footer_branch
    %11 = sbr.rel target = $region3
  $region8: #{pixel_discriminator_forward.2} parent=0 // loop_exit
    _

</llo_original>
